<compile_context>
chip_gen: v6e
topology: v6e:2x2x1
jax: 0.10.0
libtpu: 0.0.40
codegen_flags: <defaults>
</compile_context>

<pallas_src>
import math
import functools

import jax
import jax.numpy as jnp
from jax.experimental import pallas as pl
from jax.experimental.pallas import tpu as pltpu


def _layernorm(x, gamma, beta, eps=1e-5):
    # PyTorch nn.LayerNorm: biased variance, eps inside the sqrt, affine gamma/beta.
    mu = jnp.mean(x, axis=-1, keepdims=True)
    var = jnp.mean((x - mu) * (x - mu), axis=-1, keepdims=True)
    return (x - mu) * jax.lax.rsqrt(var + eps) * gamma + beta


def _mm(a, b):
    # MXU matmul: bf16 operands, f32 accumulation.
    return jnp.dot(a, b, preferred_element_type=jnp.float32)


def _block_kernel(x_ref,
                  wq_ref, bq_ref, wk_ref, bk_ref, wv_ref, bv_ref,
                  wo_ref, bo_ref,
                  ga_ref, ba_ref,
                  wi_ref, wf_ref,
                  gf_ref, bf_ref,
                  o_ref,
                  acc_ref,
                  *, d_head, causal):
    h = pl.program_id(1)
    n_heads = pl.num_programs(1)

    x = x_ref[...]                                   # (S, D) f32 (batch dim squeezed)
    S = x.shape[0]
    xb = x.astype(jnp.bfloat16)
    scale = 1.0 / math.sqrt(d_head)

    # ---- this head's q / k / v projections (contraction over full D on the MXU) ----
    wq = wq_ref[0]                                   # (D, d_head) bf16
    wk = wk_ref[0]
    wv = wv_ref[0]
    q = _mm(xb, wq) + bq_ref[0]                      # (S, d_head) f32
    k = _mm(xb, wk) + bk_ref[0]
    v = _mm(xb, wv) + bv_ref[0]

    # ---- scores: q @ k^T without materializing a transpose ----
    s = jax.lax.dot_general(
        q.astype(jnp.bfloat16), k.astype(jnp.bfloat16),
        (((1,), (1,)), ((), ())),
        preferred_element_type=jnp.float32) * scale          # (S, S) f32

    if causal:
        # finite negative (not -inf) so a fully-masked row can never produce NaN
        row = jax.lax.broadcasted_iota(jnp.int32, (S, S), 0)
        col = jax.lax.broadcasted_iota(jnp.int32, (S, S), 1)
        s = jnp.where(col <= row, s, -1e30)

    # ---- softmax (f32 statistics, approx reciprocal -> EUP) ----
    m = jnp.max(s, axis=-1, keepdims=True)
    p = jnp.exp(s - m)
    p = p * pl.reciprocal(jnp.sum(p, axis=-1, keepdims=True), approx=True)

    # ---- context and this head's slice of the output projection, accumulated ----
    ctx = _mm(p.astype(jnp.bfloat16), v.astype(jnp.bfloat16))     # (S, d_head) f32
    proj = _mm(ctx.astype(jnp.bfloat16), wo_ref[...])             # (S, D) f32

    @pl.when(h == 0)
    def _():
        acc_ref[...] = jnp.zeros_like(acc_ref)

    acc_ref[...] += proj

    # ---- after the last head: residual + LN_a, FF block, residual + LN_f ----
    @pl.when(h == n_heads - 1)
    def _():
        attn = acc_ref[...] + bo_ref[...]
        h1 = _layernorm(x + attn, ga_ref[...], ba_ref[...])
        # FFBlock: relu(h1 @ wi^T) @ wo^T   (dropout is identity in eval)
        ff = jnp.maximum(_mm(h1.astype(jnp.bfloat16), wi_ref[...]), 0.0)
        ff = _mm(ff.astype(jnp.bfloat16), wf_ref[...])
        o_ref[...] = _layernorm(h1 + ff, gf_ref[...], bf_ref[...])


def attention_nocache_transformer_block(x, params, *, n_heads, d_head, causal=False):
    """x: (B, S, D) float32 with D = n_heads * d_head."""
    B, S, D = x.shape
    assert D == n_heads * d_head
    d_ff = params["wi_t"].shape[1]
    bf16 = jnp.bfloat16

    # Pre-shape per-head weights in the wrapper so the kernel needs no reshapes:
    #   wq_t (D, D) -> (n_heads, D, d_head), biases (1, D) -> (n_heads, 1, d_head).
    def per_head_w(w):
        return w.reshape(D, n_heads, d_head).transpose(1, 0, 2).astype(bf16)

    def per_head_b(b):
        return b.reshape(n_heads, 1, d_head)

    wq_h = per_head_w(params["wq_t"]); bq_h = per_head_b(params["bq"])
    wk_h = per_head_w(params["wk_t"]); bk_h = per_head_b(params["bk"])
    wv_h = per_head_w(params["wv_t"]); bv_h = per_head_b(params["bv"])
    wo = params["wo_t"].astype(bf16)      # (D, D); rows chunked per head
    wi = params["wi_t"].astype(bf16)      # (D, d_ff)
    wf = params["wf_t"].astype(bf16)      # (d_ff, D)

    const2d = lambda shape: pl.BlockSpec(shape, lambda b, h: (0, 0))
    head_w_spec = pl.BlockSpec((1, D, d_head), lambda b, h: (h, 0, 0))
    head_b_spec = pl.BlockSpec((1, 1, d_head), lambda b, h: (h, 0, 0))
    xio_spec = lambda: pl.BlockSpec((pl.Squeezed(), S, D), lambda b, h: (b, 0, 0))

    kernel = functools.partial(_block_kernel, d_head=d_head, causal=causal)

    return pl.pallas_call(
        kernel,
        out_shape=jax.ShapeDtypeStruct((B, S, D), jnp.float32),
        grid_spec=pltpu.PrefetchScalarGridSpec(
            num_scalar_prefetch=0,
            grid=(B, n_heads),
            in_specs=[
                xio_spec(),                                    # x
                head_w_spec, head_b_spec,                      # wq, bq
                head_w_spec, head_b_spec,                      # wk, bk
                head_w_spec, head_b_spec,                      # wv, bv
                pl.BlockSpec((d_head, D), lambda b, h: (h, 0)),  # wo rows of this head
                const2d((1, D)),                               # bo
                const2d((1, D)), const2d((1, D)),              # ln_a gamma, beta
                const2d((D, d_ff)),                            # wi_t  (FF in)
                const2d((d_ff, D)),                            # wf_t  (FF out)
                const2d((1, D)), const2d((1, D)),              # ln_f gamma, beta
            ],
            out_specs=xio_spec(),
            scratch_shapes=[pltpu.VMEM((S, D), jnp.float32)],  # attention accumulator
        ),
        compiler_params=pltpu.CompilerParams(
            dimension_semantics=("parallel", "arbitrary"),
            vmem_limit_bytes=32 * 1024 * 1024,
        ),
    )(x,
      wq_h, bq_h, wk_h, bk_h, wv_h, bv_h,
      wo, params["bo"],
      params["ln_a_g"], params["ln_a_b"],
      wi, wf,
      params["ln_f_g"], params["ln_f_b"])


def init_params(key, n_heads, d_head, d_ff):
    """Deterministic synthetic parameters (shapes match the torch module's __init__)."""
    D = n_heads * d_head
    ks = jax.random.split(key, 10)

    def lin(k, fan_in, fan_out):
        # weight stored transposed: (fan_in, fan_out), matching y = x @ W^T of nn.Linear
        return (jax.random.normal(k, (fan_in, fan_out), jnp.float32)
                * (1.0 / math.sqrt(fan_in)))

    def bias(k):
        return 0.1 * jax.random.normal(k, (1, D), jnp.float32)

    return {
        # NoCacheSelfAttention projections (assumed Linear with bias)
        "wq_t": lin(ks[0], D, D), "bq": bias(ks[6]),
        "wk_t": lin(ks[1], D, D), "bk": bias(ks[7]),
        "wv_t": lin(ks[2], D, D), "bv": bias(ks[8]),
        "wo_t": lin(ks[3], D, D), "bo": bias(ks[9]),
        # LayerNorm a (PyTorch default init: gamma=1, beta=0)
        "ln_a_g": jnp.ones((1, D), jnp.float32),
        "ln_a_b": jnp.zeros((1, D), jnp.float32),
        # FFBlock: wi = Linear(D, d_ff, bias=False), wo = Linear(d_ff, D, bias=False)
        "wi_t": lin(ks[4], D, d_ff),     # == wi.weight^T
        "wf_t": lin(ks[5], d_ff, D),     # == wo.weight^T  (V = wo.weight.t())
        # LayerNorm f
        "ln_f_g": jnp.ones((1, D), jnp.float32),
        "ln_f_b": jnp.zeros((1, D), jnp.float32),
    }


def _reference(x, p, n_heads, d_head):
    """Pure-JAX reference mirroring the kernel's numerics policy:
    bf16 matmul operands, f32 accumulation, f32 softmax / LayerNorm statistics."""
    bf = lambda a: a.astype(jnp.bfloat16)
    mm = lambda a, b: jnp.dot(bf(a), bf(b), preferred_element_type=jnp.float32)
    B, S, D = x.shape
    H, dh = n_heads, d_head

    q = mm(x, p["wq_t"]) + p["bq"]
    k = mm(x, p["wk_t"]) + p["bk"]
    v = mm(x, p["wv_t"]) + p["bv"]
    qh = q.reshape(B, S, H, dh).transpose(0, 2, 1, 3)
    kh = k.reshape(B, S, H, dh).transpose(0, 2, 1, 3)
    vh = v.reshape(B, S, H, dh).transpose(0, 2, 1, 3)
    s = jnp.einsum("bhqd,bhkd->bhqk", bf(qh), bf(kh),
                   preferred_element_type=jnp.float32) / math.sqrt(dh)
    a = jax.nn.softmax(s, axis=-1)
    ctx = jnp.einsum("bhqk,bhkd->bhqd", bf(a), bf(vh),
                     preferred_element_type=jnp.float32)
    ctx = ctx.transpose(0, 2, 1, 3).reshape(B, S, D)
    attn = mm(ctx, p["wo_t"]) + p["bo"]
    h1 = _layernorm(x + attn, p["ln_a_g"], p["ln_a_b"])
    ff = jnp.maximum(mm(h1, p["wi_t"]), 0.0)
    ff = mm(ff, p["wf_t"])
    return _layernorm(h1 + ff, p["ln_f_g"], p["ln_f_b"])


if __name__ == "__main__":
    # Small config with lane-dense d_model = n_heads * d_head = 128.
    n_heads, d_head, d_ff = 4, 32, 256
    B, S = 2, 16
    D = n_heads * d_head

    key = jax.random.PRNGKey(0)
    kx, kp = jax.random.split(key)
    x = jax.random.normal(kx, (B, S, D), jnp.float32)
    params = init_params(kp, n_heads, d_head, d_ff)

    out = attention_nocache_transformer_block(
        x, params, n_heads=n_heads, d_head=d_head, causal=False)
    out = jax.block_until_ready(out)

    ref = _reference(x, params, n_heads, d_head)
    assert out.shape == (B, S, D)
    # Tolerance covers pl.reciprocal(approx=True) and MXU accumulation-order deltas.
    assert jnp.allclose(out, ref, atol=2e-2, rtol=2e-2), \
        float(jnp.max(jnp.abs(out - ref)))

    print("KERNEL_OK")
</pallas_src>

<mosaic_0001>
module attributes {stable_mosaic.version = 11 : i64} {
  func.func @_block_kernel(%arg0: i32, %arg1: i32, %arg2: memref<1x16x128xf32, #tpu.memory_space<vmem>>, %arg3: memref<1x128x32xbf16, #tpu.memory_space<vmem>>, %arg4: memref<1x1x32xf32, #tpu.memory_space<vmem>>, %arg5: memref<1x128x32xbf16, #tpu.memory_space<vmem>>, %arg6: memref<1x1x32xf32, #tpu.memory_space<vmem>>, %arg7: memref<1x128x32xbf16, #tpu.memory_space<vmem>>, %arg8: memref<1x1x32xf32, #tpu.memory_space<vmem>>, %arg9: memref<32x128xbf16, #tpu.memory_space<vmem>>, %arg10: memref<1x128xf32, #tpu.memory_space<vmem>>, %arg11: memref<1x128xf32, #tpu.memory_space<vmem>>, %arg12: memref<1x128xf32, #tpu.memory_space<vmem>>, %arg13: memref<128x256xbf16, #tpu.memory_space<vmem>>, %arg14: memref<256x128xbf16, #tpu.memory_space<vmem>>, %arg15: memref<1x128xf32, #tpu.memory_space<vmem>>, %arg16: memref<1x128xf32, #tpu.memory_space<vmem>>, %arg17: memref<1x16x128xf32, #tpu.memory_space<vmem>>, %arg18: memref<16x128xf32, #tpu.memory_space<vmem>>) attributes {dimension_semantics = [#tpu.dimension_semantics<parallel>, #tpu.dimension_semantics<arbitrary>], iteration_bounds = array<i64: 2, 4>, scalar_prefetch = 0 : i64, scratch_operands = 1 : i64, tpu.core_type = #tpu.core_type<tc>, window_params = [{transform_indices = @transform_0, window_bounds = array<i64: 1, 16, 128>}, {transform_indices = @transform_1, window_bounds = array<i64: 1, 128, 32>}, {transform_indices = @transform_2, window_bounds = array<i64: 1, 1, 32>}, {transform_indices = @transform_3, window_bounds = array<i64: 1, 128, 32>}, {transform_indices = @transform_4, window_bounds = array<i64: 1, 1, 32>}, {transform_indices = @transform_5, window_bounds = array<i64: 1, 128, 32>}, {transform_indices = @transform_6, window_bounds = array<i64: 1, 1, 32>}, {transform_indices = @transform_7, window_bounds = array<i64: 32, 128>}, {pipeline_mode = #tpu.pipeline_mode<synchronous>, transform_indices = @transform_8, window_bounds = array<i64: 1, 128>}, {pipeline_mode = #tpu.pipeline_mode<synchronous>, transform_indices = @transform_9, window_bounds = array<i64: 1, 128>}, {pipeline_mode = #tpu.pipeline_mode<synchronous>, transform_indices = @transform_10, window_bounds = array<i64: 1, 128>}, {pipeline_mode = #tpu.pipeline_mode<synchronous>, transform_indices = @transform_11, window_bounds = array<i64: 128, 256>}, {pipeline_mode = #tpu.pipeline_mode<synchronous>, transform_indices = @transform_12, window_bounds = array<i64: 256, 128>}, {pipeline_mode = #tpu.pipeline_mode<synchronous>, transform_indices = @transform_13, window_bounds = array<i64: 1, 128>}, {pipeline_mode = #tpu.pipeline_mode<synchronous>, transform_indices = @transform_14, window_bounds = array<i64: 1, 128>}, {transform_indices = @transform_15, window_bounds = array<i64: 1, 16, 128>}]} {
    %c0 = arith.constant 0 : index
    %c0_0 = arith.constant 0 : index
    %c0_1 = arith.constant 0 : index
    %0 = vector.load %arg2[%c0, %c0_0, %c0_1] : memref<1x16x128xf32, #tpu.memory_space<vmem>>, vector<1x16x128xf32>
    %1 = vector.shape_cast %0 : vector<1x16x128xf32> to vector<16x128xf32>
    %2 = arith.truncf %1 : vector<16x128xf32> to vector<16x128xbf16>
    %c0_2 = arith.constant 0 : index
    %c0_3 = arith.constant 0 : index
    %c0_4 = arith.constant 0 : index
    %3 = vector.load %arg3[%c0_2, %c0_3, %c0_4] : memref<1x128x32xbf16, #tpu.memory_space<vmem>>, vector<1x128x32xbf16>
    %4 = vector.shape_cast %3 : vector<1x128x32xbf16> to vector<128x32xbf16>
    %c0_5 = arith.constant 0 : index
    %c0_6 = arith.constant 0 : index
    %c0_7 = arith.constant 0 : index
    %5 = vector.load %arg5[%c0_5, %c0_6, %c0_7] : memref<1x128x32xbf16, #tpu.memory_space<vmem>>, vector<1x128x32xbf16>
    %6 = vector.shape_cast %5 : vector<1x128x32xbf16> to vector<128x32xbf16>
    %c0_8 = arith.constant 0 : index
    %c0_9 = arith.constant 0 : index
    %c0_10 = arith.constant 0 : index
    %7 = vector.load %arg7[%c0_8, %c0_9, %c0_10] : memref<1x128x32xbf16, #tpu.memory_space<vmem>>, vector<1x128x32xbf16>
    %8 = vector.shape_cast %7 : vector<1x128x32xbf16> to vector<128x32xbf16>
    %cst = arith.constant dense<0.000000e+00> : vector<16x32xf32>
    %9 = tpu.matmul %2, %4, %cst {dimension_numbers = #tpu.dot_dimension_numbers<[1], [0], [0], [1], [0, 0, 1, 1], [], []>} : vector<16x128xbf16>, vector<128x32xbf16>, vector<16x32xf32> -> vector<16x32xf32>
    %c0_11 = arith.constant 0 : index
    %c0_12 = arith.constant 0 : index
    %c0_13 = arith.constant 0 : index
    %10 = vector.load %arg4[%c0_11, %c0_12, %c0_13] : memref<1x1x32xf32, #tpu.memory_space<vmem>>, vector<1x1x32xf32>
    %11 = vector.shape_cast %10 : vector<1x1x32xf32> to vector<1x32xf32>
    %12 = vector.broadcast %11 : vector<1x32xf32> to vector<16x32xf32>
    %13 = arith.addf %9, %12 : vector<16x32xf32>
    %cst_14 = arith.constant dense<0.000000e+00> : vector<16x32xf32>
    %14 = tpu.matmul %2, %6, %cst_14 {dimension_numbers = #tpu.dot_dimension_numbers<[1], [0], [0], [1], [0, 0, 1, 1], [], []>} : vector<16x128xbf16>, vector<128x32xbf16>, vector<16x32xf32> -> vector<16x32xf32>
    %c0_15 = arith.constant 0 : index
    %c0_16 = arith.constant 0 : index
    %c0_17 = arith.constant 0 : index
    %15 = vector.load %arg6[%c0_15, %c0_16, %c0_17] : memref<1x1x32xf32, #tpu.memory_space<vmem>>, vector<1x1x32xf32>
    %16 = vector.shape_cast %15 : vector<1x1x32xf32> to vector<1x32xf32>
    %17 = vector.broadcast %16 : vector<1x32xf32> to vector<16x32xf32>
    %18 = arith.addf %14, %17 : vector<16x32xf32>
    %cst_18 = arith.constant dense<0.000000e+00> : vector<16x32xf32>
    %19 = tpu.matmul %2, %8, %cst_18 {dimension_numbers = #tpu.dot_dimension_numbers<[1], [0], [0], [1], [0, 0, 1, 1], [], []>} : vector<16x128xbf16>, vector<128x32xbf16>, vector<16x32xf32> -> vector<16x32xf32>
    %c0_19 = arith.constant 0 : index
    %c0_20 = arith.constant 0 : index
    %c0_21 = arith.constant 0 : index
    %20 = vector.load %arg8[%c0_19, %c0_20, %c0_21] : memref<1x1x32xf32, #tpu.memory_space<vmem>>, vector<1x1x32xf32>
    %21 = vector.shape_cast %20 : vector<1x1x32xf32> to vector<1x32xf32>
    %22 = vector.broadcast %21 : vector<1x32xf32> to vector<16x32xf32>
    %23 = arith.addf %19, %22 : vector<16x32xf32>
    %24 = arith.truncf %13 : vector<16x32xf32> to vector<16x32xbf16>
    %25 = arith.truncf %18 : vector<16x32xf32> to vector<16x32xbf16>
    %cst_22 = arith.constant dense<0.000000e+00> : vector<16x16xf32>
    %26 = tpu.matmul %24, %25, %cst_22 {dimension_numbers = #tpu.dot_dimension_numbers<[1], [1], [0], [0], [0, 0, 1, 0], [], []>} : vector<16x32xbf16>, vector<16x32xbf16>, vector<16x16xf32> -> vector<16x16xf32>
    %cst_23 = arith.constant 0.176776692 : f32
    %27 = vector.broadcast %cst_23 : f32 to vector<16x16xf32>
    %28 = arith.mulf %26, %27 : vector<16x16xf32>
    %cst_24 = arith.constant dense<0xFF800000> : vector<16xf32>
    %29 = vector.multi_reduction <maximumf>, %28, %cst_24 [1] : vector<16x16xf32> to vector<16xf32>
    %30 = vector.shape_cast %29 : vector<16xf32> to vector<16x1xf32>
    %31 = vector.broadcast %30 : vector<16x1xf32> to vector<16x16xf32>
    %32 = arith.subf %28, %31 : vector<16x16xf32>
    %33 = math.exp %32 : vector<16x16xf32>
    %cst_25 = arith.constant dense<0.000000e+00> : vector<16xf32>
    %34 = vector.multi_reduction <add>, %33, %cst_25 [1] : vector<16x16xf32> to vector<16xf32>
    %35 = vector.shape_cast %34 : vector<16xf32> to vector<16x1xf32>
    %36 = tpu.reciprocal %35 {approx = true} : vector<16x1xf32> -> vector<16x1xf32>
    %37 = vector.broadcast %36 : vector<16x1xf32> to vector<16x16xf32>
    %38 = arith.mulf %33, %37 : vector<16x16xf32>
    %39 = arith.truncf %38 : vector<16x16xf32> to vector<16x16xbf16>
    %40 = arith.truncf %23 : vector<16x32xf32> to vector<16x32xbf16>
    %cst_26 = arith.constant dense<0.000000e+00> : vector<16x32xf32>
    %41 = tpu.matmul %39, %40, %cst_26 {dimension_numbers = #tpu.dot_dimension_numbers<[1], [0], [0], [1], [0, 0, 1, 1], [], []>} : vector<16x16xbf16>, vector<16x32xbf16>, vector<16x32xf32> -> vector<16x32xf32>
    %42 = arith.truncf %41 : vector<16x32xf32> to vector<16x32xbf16>
    %c0_27 = arith.constant 0 : index
    %c0_28 = arith.constant 0 : index
    %43 = vector.load %arg9[%c0_27, %c0_28] : memref<32x128xbf16, #tpu.memory_space<vmem>>, vector<32x128xbf16>
    %cst_29 = arith.constant dense<0.000000e+00> : vector<16x128xf32>
    %44 = tpu.matmul %42, %43, %cst_29 {dimension_numbers = #tpu.dot_dimension_numbers<[1], [0], [0], [1], [0, 0, 1, 1], [], []>} : vector<16x32xbf16>, vector<32x128xbf16>, vector<16x128xf32> -> vector<16x128xf32>
    %c0_i32 = arith.constant 0 : i32
    %45 = arith.cmpi eq, %arg1, %c0_i32 : i32
    %46 = arith.extui %45 : i1 to i32
    %c0_i32_30 = arith.constant 0 : i32
    %47 = arith.cmpi ne, %46, %c0_i32_30 : i32
    scf.if %47 {
      %cst_36 = arith.constant 0.000000e+00 : f32
      %54 = vector.broadcast %cst_36 : f32 to vector<16x128xf32>
      %c0_37 = arith.constant 0 : index
      %c0_38 = arith.constant 0 : index
      %55 = vector.load %arg18[%c0_37, %c0_38] : memref<16x128xf32, #tpu.memory_space<vmem>>, vector<16x128xf32>
      tpu.vector_store %arg18[%c0_37, %c0_38], %54 {strides = array<i32>} : memref<16x128xf32, #tpu.memory_space<vmem>>, vector<16x128xf32>,
    } else {
    }
    %c0_31 = arith.constant 0 : index
    %c0_32 = arith.constant 0 : index
    %48 = vector.load %arg18[%c0_31, %c0_32] : memref<16x128xf32, #tpu.memory_space<vmem>>, vector<16x128xf32>
    %49 = arith.addf %48, %44 : vector<16x128xf32>
    %c0_33 = arith.constant 0 : index
    %c0_34 = arith.constant 0 : index
    %50 = vector.load %arg18[%c0_33, %c0_34] : memref<16x128xf32, #tpu.memory_space<vmem>>, vector<16x128xf32>
    tpu.vector_store %arg18[%c0_33, %c0_34], %49 {strides = array<i32>} : memref<16x128xf32, #tpu.memory_space<vmem>>, vector<16x128xf32>,
    %c3_i32 = arith.constant 3 : i32
    %51 = arith.cmpi eq, %arg1, %c3_i32 : i32
    %52 = arith.extui %51 : i1 to i32
    %c0_i32_35 = arith.constant 0 : i32
    %53 = arith.cmpi ne, %52, %c0_i32_35 : i32
    scf.if %53 {
      %c0_36 = arith.constant 0 : index
      %c0_37 = arith.constant 0 : index
      %54 = vector.load %arg18[%c0_36, %c0_37] : memref<16x128xf32, #tpu.memory_space<vmem>>, vector<16x128xf32>
      %c0_38 = arith.constant 0 : index
      %c0_39 = arith.constant 0 : index
      %55 = vector.load %arg10[%c0_38, %c0_39] : memref<1x128xf32, #tpu.memory_space<vmem>>, vector<1x128xf32>
      %56 = vector.broadcast %55 : vector<1x128xf32> to vector<16x128xf32>
      %57 = arith.addf %54, %56 : vector<16x128xf32>
      %58 = arith.addf %1, %57 : vector<16x128xf32>
      %c0_40 = arith.constant 0 : index
      %c0_41 = arith.constant 0 : index
      %59 = vector.load %arg11[%c0_40, %c0_41] : memref<1x128xf32, #tpu.memory_space<vmem>>, vector<1x128xf32>
      %c0_42 = arith.constant 0 : index
      %c0_43 = arith.constant 0 : index
      %60 = vector.load %arg12[%c0_42, %c0_43] : memref<1x128xf32, #tpu.memory_space<vmem>>, vector<1x128xf32>
      %cst_44 = arith.constant dense<0.000000e+00> : vector<16xf32>
      %61 = vector.multi_reduction <add>, %58, %cst_44 [1] : vector<16x128xf32> to vector<16xf32>
      %62 = vector.shape_cast %61 : vector<16xf32> to vector<16x1xf32>
      %cst_45 = arith.constant 1.280000e+02 : f32
      %63 = vector.broadcast %cst_45 : f32 to vector<16x1xf32>
      %64 = arith.divf %62, %63 : vector<16x1xf32>
      %65 = vector.broadcast %64 : vector<16x1xf32> to vector<16x128xf32>
      %66 = arith.subf %58, %65 : vector<16x128xf32>
      %67 = vector.broadcast %64 : vector<16x1xf32> to vector<16x128xf32>
      %68 = arith.subf %58, %67 : vector<16x128xf32>
      %69 = arith.mulf %66, %68 : vector<16x128xf32>
      %cst_46 = arith.constant dense<0.000000e+00> : vector<16xf32>
      %70 = vector.multi_reduction <add>, %69, %cst_46 [1] : vector<16x128xf32> to vector<16xf32>
      %71 = vector.shape_cast %70 : vector<16xf32> to vector<16x1xf32>
      %cst_47 = arith.constant 1.280000e+02 : f32
      %72 = vector.broadcast %cst_47 : f32 to vector<16x1xf32>
      %73 = arith.divf %71, %72 : vector<16x1xf32>
      %74 = vector.broadcast %64 : vector<16x1xf32> to vector<16x128xf32>
      %75 = arith.subf %58, %74 : vector<16x128xf32>
      %cst_48 = arith.constant 9.99999974E-6 : f32
      %76 = vector.broadcast %cst_48 : f32 to vector<16x1xf32>
      %77 = arith.addf %73, %76 : vector<16x1xf32>
      %78 = math.rsqrt %77 : vector<16x1xf32>
      %79 = vector.broadcast %78 : vector<16x1xf32> to vector<16x128xf32>
      %80 = arith.mulf %75, %79 : vector<16x128xf32>
      %81 = vector.broadcast %59 : vector<1x128xf32> to vector<16x128xf32>
      %82 = arith.mulf %80, %81 : vector<16x128xf32>
      %83 = vector.broadcast %60 : vector<1x128xf32> to vector<16x128xf32>
      %84 = arith.addf %82, %83 : vector<16x128xf32>
      %85 = arith.truncf %84 : vector<16x128xf32> to vector<16x128xbf16>
      %c0_49 = arith.constant 0 : index
      %c0_50 = arith.constant 0 : index
      %86 = vector.load %arg13[%c0_49, %c0_50] : memref<128x256xbf16, #tpu.memory_space<vmem>>, vector<128x256xbf16>
      %cst_51 = arith.constant dense<0.000000e+00> : vector<16x256xf32>
      %87 = tpu.matmul %85, %86, %cst_51 {dimension_numbers = #tpu.dot_dimension_numbers<[1], [0], [0], [1], [0, 0, 1, 1], [], []>} : vector<16x128xbf16>, vector<128x256xbf16>, vector<16x256xf32> -> vector<16x256xf32>
      %cst_52 = arith.constant 0.000000e+00 : f32
      %88 = vector.broadcast %cst_52 : f32 to vector<16x256xf32>
      %89 = arith.maximumf %87, %88 : vector<16x256xf32>
      %90 = arith.truncf %89 : vector<16x256xf32> to vector<16x256xbf16>
      %c0_53 = arith.constant 0 : index
      %c0_54 = arith.constant 0 : index
      %91 = vector.load %arg14[%c0_53, %c0_54] : memref<256x128xbf16, #tpu.memory_space<vmem>>, vector<256x128xbf16>
      %cst_55 = arith.constant dense<0.000000e+00> : vector<16x128xf32>
      %92 = tpu.matmul %90, %91, %cst_55 {dimension_numbers = #tpu.dot_dimension_numbers<[1], [0], [0], [1], [0, 0, 1, 1], [], []>} : vector<16x256xbf16>, vector<256x128xbf16>, vector<16x128xf32> -> vector<16x128xf32>
      %93 = arith.addf %84, %92 : vector<16x128xf32>
      %c0_56 = arith.constant 0 : index
      %c0_57 = arith.constant 0 : index
      %94 = vector.load %arg15[%c0_56, %c0_57] : memref<1x128xf32, #tpu.memory_space<vmem>>, vector<1x128xf32>
      %c0_58 = arith.constant 0 : index
      %c0_59 = arith.constant 0 : index
      %95 = vector.load %arg16[%c0_58, %c0_59] : memref<1x128xf32, #tpu.memory_space<vmem>>, vector<1x128xf32>
      %cst_60 = arith.constant dense<0.000000e+00> : vector<16xf32>
      %96 = vector.multi_reduction <add>, %93, %cst_60 [1] : vector<16x128xf32> to vector<16xf32>
      %97 = vector.shape_cast %96 : vector<16xf32> to vector<16x1xf32>
      %cst_61 = arith.constant 1.280000e+02 : f32
      %98 = vector.broadcast %cst_61 : f32 to vector<16x1xf32>
      %99 = arith.divf %97, %98 : vector<16x1xf32>
      %100 = vector.broadcast %99 : vector<16x1xf32> to vector<16x128xf32>
      %101 = arith.subf %93, %100 : vector<16x128xf32>
      %102 = vector.broadcast %99 : vector<16x1xf32> to vector<16x128xf32>
      %103 = arith.subf %93, %102 : vector<16x128xf32>
      %104 = arith.mulf %101, %103 : vector<16x128xf32>
      %cst_62 = arith.constant dense<0.000000e+00> : vector<16xf32>
      %105 = vector.multi_reduction <add>, %104, %cst_62 [1] : vector<16x128xf32> to vector<16xf32>
      %106 = vector.shape_cast %105 : vector<16xf32> to vector<16x1xf32>
      %cst_63 = arith.constant 1.280000e+02 : f32
      %107 = vector.broadcast %cst_63 : f32 to vector<16x1xf32>
      %108 = arith.divf %106, %107 : vector<16x1xf32>
      %109 = vector.broadcast %99 : vector<16x1xf32> to vector<16x128xf32>
      %110 = arith.subf %93, %109 : vector<16x128xf32>
      %cst_64 = arith.constant 9.99999974E-6 : f32
      %111 = vector.broadcast %cst_64 : f32 to vector<16x1xf32>
      %112 = arith.addf %108, %111 : vector<16x1xf32>
      %113 = math.rsqrt %112 : vector<16x1xf32>
      %114 = vector.broadcast %113 : vector<16x1xf32> to vector<16x128xf32>
      %115 = arith.mulf %110, %114 : vector<16x128xf32>
      %116 = vector.broadcast %94 : vector<1x128xf32> to vector<16x128xf32>
      %117 = arith.mulf %115, %116 : vector<16x128xf32>
      %118 = vector.broadcast %95 : vector<1x128xf32> to vector<16x128xf32>
      %119 = arith.addf %117, %118 : vector<16x128xf32>
      %c0_65 = arith.constant 0 : index
      %c0_66 = arith.constant 0 : index
      %c0_67 = arith.constant 0 : index
      %120 = vector.load %arg17[%c0_65, %c0_66, %c0_67] : memref<1x16x128xf32, #tpu.memory_space<vmem>>, vector<1x16x128xf32>
      %121 = vector.shape_cast %120 : vector<1x16x128xf32> to vector<16x128xf32>
      %122 = vector.shape_cast %119 : vector<16x128xf32> to vector<1x16x128xf32>
      tpu.vector_store %arg17[%c0_65, %c0_66, %c0_67], %122 {strides = array<i32>} : memref<1x16x128xf32, #tpu.memory_space<vmem>>, vector<1x16x128xf32>,
    } else {
    }
    return
  }
  func.func @transform_0(%arg0: i32, %arg1: i32) -> (i32, i32, i32) {
    %c0_i32 = arith.constant 0 : i32
    %c0_i32_0 = arith.constant 0 : i32
    %c0_i32_1 = arith.constant 0 : i32
    return %arg0, %c0_i32, %c0_i32_0 : i32, i32, i32
  }
  func.func @transform_1(%arg0: i32, %arg1: i32) -> (i32, i32, i32) {
    %c0_i32 = arith.constant 0 : i32
    %c0_i32_0 = arith.constant 0 : i32
    %c0_i32_1 = arith.constant 0 : i32
    return %arg1, %c0_i32, %c0_i32_0 : i32, i32, i32
  }
  func.func @transform_2(%arg0: i32, %arg1: i32) -> (i32, i32, i32) {
    %c0_i32 = arith.constant 0 : i32
    %c0_i32_0 = arith.constant 0 : i32
    %c0_i32_1 = arith.constant 0 : i32
    return %arg1, %c0_i32, %c0_i32_0 : i32, i32, i32
  }
  func.func @transform_3(%arg0: i32, %arg1: i32) -> (i32, i32, i32) {
    %c0_i32 = arith.constant 0 : i32
    %c0_i32_0 = arith.constant 0 : i32
    %c0_i32_1 = arith.constant 0 : i32
    return %arg1, %c0_i32, %c0_i32_0 : i32, i32, i32
  }
  func.func @transform_4(%arg0: i32, %arg1: i32) -> (i32, i32, i32) {
    %c0_i32 = arith.constant 0 : i32
    %c0_i32_0 = arith.constant 0 : i32
    %c0_i32_1 = arith.constant 0 : i32
    return %arg1, %c0_i32, %c0_i32_0 : i32, i32, i32
  }
  func.func @transform_5(%arg0: i32, %arg1: i32) -> (i32, i32, i32) {
    %c0_i32 = arith.constant 0 : i32
    %c0_i32_0 = arith.constant 0 : i32
    %c0_i32_1 = arith.constant 0 : i32
    return %arg1, %c0_i32, %c0_i32_0 : i32, i32, i32
  }
  func.func @transform_6(%arg0: i32, %arg1: i32) -> (i32, i32, i32) {
    %c0_i32 = arith.constant 0 : i32
    %c0_i32_0 = arith.constant 0 : i32
    %c0_i32_1 = arith.constant 0 : i32
    return %arg1, %c0_i32, %c0_i32_0 : i32, i32, i32
  }
  func.func @transform_7(%arg0: i32, %arg1: i32) -> (i32, i32) {
    %c0_i32 = arith.constant 0 : i32
    %c0_i32_0 = arith.constant 0 : i32
    return %arg1, %c0_i32 : i32, i32
  }
  func.func @transform_8(%arg0: i32, %arg1: i32) -> (i32, i32) {
    %c0_i32 = arith.constant 0 : i32
    %c0_i32_0 = arith.constant 0 : i32
    %c0_i32_1 = arith.constant 0 : i32
    return %c0_i32, %c0_i32_0 : i32, i32
  }
  func.func @transform_9(%arg0: i32, %arg1: i32) -> (i32, i32) {
    %c0_i32 = arith.constant 0 : i32
    %c0_i32_0 = arith.constant 0 : i32
    %c0_i32_1 = arith.constant 0 : i32
    return %c0_i32, %c0_i32_0 : i32, i32
  }
  func.func @transform_10(%arg0: i32, %arg1: i32) -> (i32, i32) {
    %c0_i32 = arith.constant 0 : i32
    %c0_i32_0 = arith.constant 0 : i32
    %c0_i32_1 = arith.constant 0 : i32
    return %c0_i32, %c0_i32_0 : i32, i32
  }
  func.func @transform_11(%arg0: i32, %arg1: i32) -> (i32, i32) {
    %c0_i32 = arith.constant 0 : i32
    %c0_i32_0 = arith.constant 0 : i32
    %c0_i32_1 = arith.constant 0 : i32
    return %c0_i32, %c0_i32_0 : i32, i32
  }
  func.func @transform_12(%arg0: i32, %arg1: i32) -> (i32, i32) {
    %c0_i32 = arith.constant 0 : i32
    %c0_i32_0 = arith.constant 0 : i32
    %c0_i32_1 = arith.constant 0 : i32
    return %c0_i32, %c0_i32_0 : i32, i32
  }
  func.func @transform_13(%arg0: i32, %arg1: i32) -> (i32, i32) {
    %c0_i32 = arith.constant 0 : i32
    %c0_i32_0 = arith.constant 0 : i32
    %c0_i32_1 = arith.constant 0 : i32
    return %c0_i32, %c0_i32_0 : i32, i32
  }
  func.func @transform_14(%arg0: i32, %arg1: i32) -> (i32, i32) {
    %c0_i32 = arith.constant 0 : i32
    %c0_i32_0 = arith.constant 0 : i32
    %c0_i32_1 = arith.constant 0 : i32
    return %c0_i32, %c0_i32_0 : i32, i32
  }
  func.func @transform_15(%arg0: i32, %arg1: i32) -> (i32, i32, i32) {
    %c0_i32 = arith.constant 0 : i32
    %c0_i32_0 = arith.constant 0 : i32
    %c0_i32_1 = arith.constant 0 : i32
    return %arg0, %c0_i32, %c0_i32_0 : i32, i32, i32
  }
}

</mosaic_0001>

<llo_original>
// kernel: tpu_custom_call.1
$region0: #{tpu_custom_call.1}
  #allocation0 [shape = 'u32[]', space=smem, size = 0x4, offset = 0x4, fixed_abs, tag = 'smem constant byte address 0x4 - core index']
  #allocation1 [shape = 'u32[144,128]{1,0:T(1,128)}', space=vmem, size = 0x12000, scoped, tag = 'internal scratch']
  #allocation2 [shape = 'f32[16,128]{1,0:T(8,128)}', space=vmem, size = 0x2000, scoped, tag = 'scratch operand']
  %s0 = inlined_call_operand.vmem [shape: f32[2,16,128], index: 0, kind: input, shape index: {}]
  %s1 = inlined_call_operand.vmem [shape: bf16[4,128,32], index: 1, kind: input, shape index: {}]
  %s2 = inlined_call_operand.vmem [shape: f32[4,1,32], index: 2, kind: input, shape index: {}]
  %s3 = inlined_call_operand.vmem [shape: bf16[4,128,32], index: 3, kind: input, shape index: {}]
  %s4 = inlined_call_operand.vmem [shape: f32[4,1,32], index: 4, kind: input, shape index: {}]
  %s5 = inlined_call_operand.vmem [shape: bf16[4,128,32], index: 5, kind: input, shape index: {}]
  %s6 = inlined_call_operand.vmem [shape: f32[4,1,32], index: 6, kind: input, shape index: {}]
  %s7 = inlined_call_operand.vmem [shape: bf16[128,128], index: 7, kind: input, shape index: {}]
  %s8 = inlined_call_operand.vmem [shape: f32[1,128], index: 8, kind: input, shape index: {}]
  %s9 = inlined_call_operand.vmem [shape: f32[1,128], index: 9, kind: input, shape index: {}]
  %s10 = inlined_call_operand.vmem [shape: f32[1,128], index: 10, kind: input, shape index: {}]
  %s11 = inlined_call_operand.vmem [shape: bf16[128,256], index: 11, kind: input, shape index: {}]
  %s12 = inlined_call_operand.vmem [shape: bf16[256,128], index: 12, kind: input, shape index: {}]
  %s13 = inlined_call_operand.vmem [shape: f32[1,128], index: 13, kind: input, shape index: {}]
  %s14 = inlined_call_operand.vmem [shape: f32[1,128], index: 14, kind: input, shape index: {}]
  %s15 = inlined_call_operand.hbm [shape: f32[2,16,128], index: 15, kind: output, shape index: {}]
  %s16 = sld [smem:[#allocation0]]
  $region101: #{tpu_custom_call.1} parent=0
    _
  %s18 = ssub.s32 1, %s16
  %s19 = scalar_select 0, %s18, %s16
  $region1: #{tpu_custom_call.1} parent=0
    #allocation3 [shape = 'u8[16384]{0}', space=vmem, size = 0x4000, scoped, tag = 'output window, operand 0']
    #allocation4 [shape = 's32[2]{0}', space=sflag, size = 0x8, scoped, tag = 'scoped memory for tpu_custom_call.1']
    %20 = vsyncpa [#allocation4], 0
    %s21 = scalar_lea.sflag [#allocation4], 1
    %22 = vsyncpa %s21, 0
    loop: start=0, step=1, limit=10
    $region2: #{tpu_custom_call.1} parent=1 // loop_pre_header
      _
    $region3: #{tpu_custom_call.1} parent=1 // loop_header
      %s24 = sphi 0, %s28
      %p25 = scmp.ge.s32.totalorder %s24, 10
      %s31 = sphi 0, %s43
      %s32 = sphi 0, %s39
      %s33 = sphi 0, %s31
      %s34 = sphi 0, %s32
      %s35 = sphi 0, %s33
      %s36 = sphi 0, %s34
      %s46 = sphi 0, %s48
      %s49 = sphi 0, %s46
      %s50 = sphi 0, %s49
      %s66 = sphi 0, %s50
      %s72 = sphi 0, %s74
      %s75 = sphi 0, %s72
      %s76 = sphi 0, %s75
      %s92 = sphi 0, %s76
      %s98 = sphi 0, %s100
      %s101 = sphi 0, %s98
      %s102 = sphi 0, %s101
      %s118 = sphi 0, %s102
      %s124 = sphi 0, %s126
      %s127 = sphi 0, %s124
      %s128 = sphi 0, %s127
      %s144 = sphi 0, %s128
      %s150 = sphi 0, %s152
      %s153 = sphi 0, %s150
      %s154 = sphi 0, %s153
      %s170 = sphi 0, %s154
      %s176 = sphi 0, %s178
      %s179 = sphi 0, %s176
      %s180 = sphi 0, %s179
      %s196 = sphi 0, %s180
      %s202 = sphi 0, %s204
      %s205 = sphi 0, %s202
      %s206 = sphi 0, %s205
      %s222 = sphi 0, %s206
      %s228 = sphi 0, %s230
      %s231 = sphi 0, %s228
      %s232 = sphi 0, %s231
      %s248 = sphi 0, %s232
      %s252 = sphi 0, %s252
      %s254 = sphi 0, %s252
      %s255 = sphi 0, %s254
      %s269 = sphi 0, %s255
      %s273 = sphi 0, %s273
      %s275 = sphi 0, %s273
      %s276 = sphi 0, %s275
      %s290 = sphi 0, %s276
      %s294 = sphi 0, %s294
      %s296 = sphi 0, %s294
      %s297 = sphi 0, %s296
      %s311 = sphi 0, %s297
      %s315 = sphi 0, %s315
      %s317 = sphi 0, %s315
      %s318 = sphi 0, %s317
      %s332 = sphi 0, %s318
      %s336 = sphi 0, %s336
      %s338 = sphi 0, %s336
      %s339 = sphi 0, %s338
      %s353 = sphi 0, %s339
      %s357 = sphi 0, %s357
      %s359 = sphi 0, %s357
      %s360 = sphi 0, %s359
      %s374 = sphi 0, %s360
      %s378 = sphi 0, %s378
      %s380 = sphi 0, %s378
      %s381 = sphi 0, %s380
      %s395 = sphi 0, %s381
      %s401 = sphi 0, %s403
      %s404 = sphi 0, %s401
      %s405 = sphi 0, %s404
      %s421 = sphi 0, %s405
    $region4: #{tpu_custom_call.1} parent=1 // loop_header_branch
      %27 = sbr.rel (%p25) target = $region8
    $region5: #{tpu_custom_call.1} parent=1 // loop_body
      %s29 = ssub.s32 %s24, 1
      %s30 = ssub.s32 %s24, 2
      %s37 = sadd.s32 1, %s32
      %p38 = scmp.ge.s32.totalorder %s37, 4
      %s39 = scalar_select %p38, 0, %s37
      %s40 = sadd.s32 1, %s31
      %s41 = scalar_select %p38, %s40, %s31
      %p42 = scmp.ge.s32.totalorder %s41, 2
      %s43 = scalar_select %p42, 0, %s41
      %s44 = ssub.s32 %s31, %s43
      %p45 = scmp.eq.s32.totalorder %s44, 0
      %s47 = sadd.s32 %s46, 1
      %s48 = scalar_select %p45, %s46, %s47
      %p51 = pneg %p45
      %p52 = scmp.eq.s32.totalorder %s24, 7
      %p53 = por %p51, %p52
      %p54 = scmp.ne.s32.totalorder %s46, %s49
      %p55 = scmp.eq.s32.totalorder %s24, 0
      %p56 = por %p54, %p55
      %p57 = scmp.ne.s32.totalorder %s46, %s49
      %p58 = scmp.eq.s32.totalorder %s29, 7
      %p59 = por %p57, %p58
      %p60 = scmp.ne.s32.totalorder %s49, %s50
      %p61 = scmp.eq.s32.totalorder %s29, 0
      %p62 = por %p60, %p61
      %p63 = scmp.ne.s32.totalorder %s49, %s50
      %p64 = scmp.eq.s32.totalorder %s30, 7
      %p65 = por %p63, %p64
      %p67 = scmp.ne.s32.totalorder %s50, %s66
      %p68 = scmp.eq.s32.totalorder %s30, 0
      %p69 = por %p67, %p68
      %s70 = ssub.s32 %s32, %s39
      %p71 = scmp.eq.s32.totalorder %s70, 0
      %s73 = sadd.s32 %s72, 1
      %s74 = scalar_select %p71, %s72, %s73
      %p77 = pneg %p71
      %p78 = scmp.eq.s32.totalorder %s24, 7
      %p79 = por %p77, %p78
      %p80 = scmp.ne.s32.totalorder %s72, %s75
      %p81 = scmp.eq.s32.totalorder %s24, 0
      %p82 = por %p80, %p81
      %p83 = scmp.ne.s32.totalorder %s72, %s75
      %p84 = scmp.eq.s32.totalorder %s29, 7
      %p85 = por %p83, %p84
      %p86 = scmp.ne.s32.totalorder %s75, %s76
      %p87 = scmp.eq.s32.totalorder %s29, 0
      %p88 = por %p86, %p87
      %p89 = scmp.ne.s32.totalorder %s75, %s76
      %p90 = scmp.eq.s32.totalorder %s30, 7
      %p91 = por %p89, %p90
      %p93 = scmp.ne.s32.totalorder %s76, %s92
      %p94 = scmp.eq.s32.totalorder %s30, 0
      %p95 = por %p93, %p94
      %s96 = ssub.s32 %s32, %s39
      %p97 = scmp.eq.s32.totalorder %s96, 0
      %s99 = sadd.s32 %s98, 1
      %s100 = scalar_select %p97, %s98, %s99
      %p103 = pneg %p97
      %p104 = scmp.eq.s32.totalorder %s24, 7
      %p105 = por %p103, %p104
      %p106 = scmp.ne.s32.totalorder %s98, %s101
      %p107 = scmp.eq.s32.totalorder %s24, 0
      %p108 = por %p106, %p107
      %p109 = scmp.ne.s32.totalorder %s98, %s101
      %p110 = scmp.eq.s32.totalorder %s29, 7
      %p111 = por %p109, %p110
      %p112 = scmp.ne.s32.totalorder %s101, %s102
      %p113 = scmp.eq.s32.totalorder %s29, 0
      %p114 = por %p112, %p113
      %p115 = scmp.ne.s32.totalorder %s101, %s102
      %p116 = scmp.eq.s32.totalorder %s30, 7
      %p117 = por %p115, %p116
      %p119 = scmp.ne.s32.totalorder %s102, %s118
      %p120 = scmp.eq.s32.totalorder %s30, 0
      %p121 = por %p119, %p120
      %s122 = ssub.s32 %s32, %s39
      %p123 = scmp.eq.s32.totalorder %s122, 0
      %s125 = sadd.s32 %s124, 1
      %s126 = scalar_select %p123, %s124, %s125
      %p129 = pneg %p123
      %p130 = scmp.eq.s32.totalorder %s24, 7
      %p131 = por %p129, %p130
      %p132 = scmp.ne.s32.totalorder %s124, %s127
      %p133 = scmp.eq.s32.totalorder %s24, 0
      %p134 = por %p132, %p133
      %p135 = scmp.ne.s32.totalorder %s124, %s127
      %p136 = scmp.eq.s32.totalorder %s29, 7
      %p137 = por %p135, %p136
      %p138 = scmp.ne.s32.totalorder %s127, %s128
      %p139 = scmp.eq.s32.totalorder %s29, 0
      %p140 = por %p138, %p139
      %p141 = scmp.ne.s32.totalorder %s127, %s128
      %p142 = scmp.eq.s32.totalorder %s30, 7
      %p143 = por %p141, %p142
      %p145 = scmp.ne.s32.totalorder %s128, %s144
      %p146 = scmp.eq.s32.totalorder %s30, 0
      %p147 = por %p145, %p146
      %s148 = ssub.s32 %s32, %s39
      %p149 = scmp.eq.s32.totalorder %s148, 0
      %s151 = sadd.s32 %s150, 1
      %s152 = scalar_select %p149, %s150, %s151
      %p155 = pneg %p149
      %p156 = scmp.eq.s32.totalorder %s24, 7
      %p157 = por %p155, %p156
      %p158 = scmp.ne.s32.totalorder %s150, %s153
      %p159 = scmp.eq.s32.totalorder %s24, 0
      %p160 = por %p158, %p159
      %p161 = scmp.ne.s32.totalorder %s150, %s153
      %p162 = scmp.eq.s32.totalorder %s29, 7
      %p163 = por %p161, %p162
      %p164 = scmp.ne.s32.totalorder %s153, %s154
      %p165 = scmp.eq.s32.totalorder %s29, 0
      %p166 = por %p164, %p165
      %p167 = scmp.ne.s32.totalorder %s153, %s154
      %p168 = scmp.eq.s32.totalorder %s30, 7
      %p169 = por %p167, %p168
      %p171 = scmp.ne.s32.totalorder %s154, %s170
      %p172 = scmp.eq.s32.totalorder %s30, 0
      %p173 = por %p171, %p172
      %s174 = ssub.s32 %s32, %s39
      %p175 = scmp.eq.s32.totalorder %s174, 0
      %s177 = sadd.s32 %s176, 1
      %s178 = scalar_select %p175, %s176, %s177
      %p181 = pneg %p175
      %p182 = scmp.eq.s32.totalorder %s24, 7
      %p183 = por %p181, %p182
      %p184 = scmp.ne.s32.totalorder %s176, %s179
      %p185 = scmp.eq.s32.totalorder %s24, 0
      %p186 = por %p184, %p185
      %p187 = scmp.ne.s32.totalorder %s176, %s179
      %p188 = scmp.eq.s32.totalorder %s29, 7
      %p189 = por %p187, %p188
      %p190 = scmp.ne.s32.totalorder %s179, %s180
      %p191 = scmp.eq.s32.totalorder %s29, 0
      %p192 = por %p190, %p191
      %p193 = scmp.ne.s32.totalorder %s179, %s180
      %p194 = scmp.eq.s32.totalorder %s30, 7
      %p195 = por %p193, %p194
      %p197 = scmp.ne.s32.totalorder %s180, %s196
      %p198 = scmp.eq.s32.totalorder %s30, 0
      %p199 = por %p197, %p198
      %s200 = ssub.s32 %s32, %s39
      %p201 = scmp.eq.s32.totalorder %s200, 0
      %s203 = sadd.s32 %s202, 1
      %s204 = scalar_select %p201, %s202, %s203
      %p207 = pneg %p201
      %p208 = scmp.eq.s32.totalorder %s24, 7
      %p209 = por %p207, %p208
      %p210 = scmp.ne.s32.totalorder %s202, %s205
      %p211 = scmp.eq.s32.totalorder %s24, 0
      %p212 = por %p210, %p211
      %p213 = scmp.ne.s32.totalorder %s202, %s205
      %p214 = scmp.eq.s32.totalorder %s29, 7
      %p215 = por %p213, %p214
      %p216 = scmp.ne.s32.totalorder %s205, %s206
      %p217 = scmp.eq.s32.totalorder %s29, 0
      %p218 = por %p216, %p217
      %p219 = scmp.ne.s32.totalorder %s205, %s206
      %p220 = scmp.eq.s32.totalorder %s30, 7
      %p221 = por %p219, %p220
      %p223 = scmp.ne.s32.totalorder %s206, %s222
      %p224 = scmp.eq.s32.totalorder %s30, 0
      %p225 = por %p223, %p224
      %s226 = ssub.s32 %s32, %s39
      %p227 = scmp.eq.s32.totalorder %s226, 0
      %s229 = sadd.s32 %s228, 1
      %s230 = scalar_select %p227, %s228, %s229
      %p233 = pneg %p227
      %p234 = scmp.eq.s32.totalorder %s24, 7
      %p235 = por %p233, %p234
      %p236 = scmp.ne.s32.totalorder %s228, %s231
      %p237 = scmp.eq.s32.totalorder %s24, 0
      %p238 = por %p236, %p237
      %p239 = scmp.ne.s32.totalorder %s228, %s231
      %p240 = scmp.eq.s32.totalorder %s29, 7
      %p241 = por %p239, %p240
      %p242 = scmp.ne.s32.totalorder %s231, %s232
      %p243 = scmp.eq.s32.totalorder %s29, 0
      %p244 = por %p242, %p243
      %p245 = scmp.ne.s32.totalorder %s231, %s232
      %p246 = scmp.eq.s32.totalorder %s30, 7
      %p247 = por %p245, %p246
      %p249 = scmp.ne.s32.totalorder %s232, %s248
      %p250 = scmp.eq.s32.totalorder %s30, 0
      %p251 = por %p249, %p250
      %s253 = sadd.s32 %s252, 1
      %p256 = scmp.eq.s32.totalorder %s24, 7
      %p257 = scmp.ne.s32.totalorder %s252, %s254
      %p258 = scmp.eq.s32.totalorder %s24, 0
      %p259 = por %p257, %p258
      %p260 = scmp.ne.s32.totalorder %s252, %s254
      %p261 = scmp.eq.s32.totalorder %s29, 7
      %p262 = por %p260, %p261
      %p263 = scmp.ne.s32.totalorder %s254, %s255
      %p264 = scmp.eq.s32.totalorder %s29, 0
      %p265 = por %p263, %p264
      %p266 = scmp.ne.s32.totalorder %s254, %s255
      %p267 = scmp.eq.s32.totalorder %s30, 7
      %p268 = por %p266, %p267
      %p270 = scmp.ne.s32.totalorder %s255, %s269
      %p271 = scmp.eq.s32.totalorder %s30, 0
      %p272 = por %p270, %p271
      %s274 = sadd.s32 %s273, 1
      %p277 = scmp.eq.s32.totalorder %s24, 7
      %p278 = scmp.ne.s32.totalorder %s273, %s275
      %p279 = scmp.eq.s32.totalorder %s24, 0
      %p280 = por %p278, %p279
      %p281 = scmp.ne.s32.totalorder %s273, %s275
      %p282 = scmp.eq.s32.totalorder %s29, 7
      %p283 = por %p281, %p282
      %p284 = scmp.ne.s32.totalorder %s275, %s276
      %p285 = scmp.eq.s32.totalorder %s29, 0
      %p286 = por %p284, %p285
      %p287 = scmp.ne.s32.totalorder %s275, %s276
      %p288 = scmp.eq.s32.totalorder %s30, 7
      %p289 = por %p287, %p288
      %p291 = scmp.ne.s32.totalorder %s276, %s290
      %p292 = scmp.eq.s32.totalorder %s30, 0
      %p293 = por %p291, %p292
      %s295 = sadd.s32 %s294, 1
      %p298 = scmp.eq.s32.totalorder %s24, 7
      %p299 = scmp.ne.s32.totalorder %s294, %s296
      %p300 = scmp.eq.s32.totalorder %s24, 0
      %p301 = por %p299, %p300
      %p302 = scmp.ne.s32.totalorder %s294, %s296
      %p303 = scmp.eq.s32.totalorder %s29, 7
      %p304 = por %p302, %p303
      %p305 = scmp.ne.s32.totalorder %s296, %s297
      %p306 = scmp.eq.s32.totalorder %s29, 0
      %p307 = por %p305, %p306
      %p308 = scmp.ne.s32.totalorder %s296, %s297
      %p309 = scmp.eq.s32.totalorder %s30, 7
      %p310 = por %p308, %p309
      %p312 = scmp.ne.s32.totalorder %s297, %s311
      %p313 = scmp.eq.s32.totalorder %s30, 0
      %p314 = por %p312, %p313
      %s316 = sadd.s32 %s315, 1
      %p319 = scmp.eq.s32.totalorder %s24, 7
      %p320 = scmp.ne.s32.totalorder %s315, %s317
      %p321 = scmp.eq.s32.totalorder %s24, 0
      %p322 = por %p320, %p321
      %p323 = scmp.ne.s32.totalorder %s315, %s317
      %p324 = scmp.eq.s32.totalorder %s29, 7
      %p325 = por %p323, %p324
      %p326 = scmp.ne.s32.totalorder %s317, %s318
      %p327 = scmp.eq.s32.totalorder %s29, 0
      %p328 = por %p326, %p327
      %p329 = scmp.ne.s32.totalorder %s317, %s318
      %p330 = scmp.eq.s32.totalorder %s30, 7
      %p331 = por %p329, %p330
      %p333 = scmp.ne.s32.totalorder %s318, %s332
      %p334 = scmp.eq.s32.totalorder %s30, 0
      %p335 = por %p333, %p334
      %s337 = sadd.s32 %s336, 1
      %p340 = scmp.eq.s32.totalorder %s24, 7
      %p341 = scmp.ne.s32.totalorder %s336, %s338
      %p342 = scmp.eq.s32.totalorder %s24, 0
      %p343 = por %p341, %p342
      %p344 = scmp.ne.s32.totalorder %s336, %s338
      %p345 = scmp.eq.s32.totalorder %s29, 7
      %p346 = por %p344, %p345
      %p347 = scmp.ne.s32.totalorder %s338, %s339
      %p348 = scmp.eq.s32.totalorder %s29, 0
      %p349 = por %p347, %p348
      %p350 = scmp.ne.s32.totalorder %s338, %s339
      %p351 = scmp.eq.s32.totalorder %s30, 7
      %p352 = por %p350, %p351
      %p354 = scmp.ne.s32.totalorder %s339, %s353
      %p355 = scmp.eq.s32.totalorder %s30, 0
      %p356 = por %p354, %p355
      %s358 = sadd.s32 %s357, 1
      %p361 = scmp.eq.s32.totalorder %s24, 7
      %p362 = scmp.ne.s32.totalorder %s357, %s359
      %p363 = scmp.eq.s32.totalorder %s24, 0
      %p364 = por %p362, %p363
      %p365 = scmp.ne.s32.totalorder %s357, %s359
      %p366 = scmp.eq.s32.totalorder %s29, 7
      %p367 = por %p365, %p366
      %p368 = scmp.ne.s32.totalorder %s359, %s360
      %p369 = scmp.eq.s32.totalorder %s29, 0
      %p370 = por %p368, %p369
      %p371 = scmp.ne.s32.totalorder %s359, %s360
      %p372 = scmp.eq.s32.totalorder %s30, 7
      %p373 = por %p371, %p372
      %p375 = scmp.ne.s32.totalorder %s360, %s374
      %p376 = scmp.eq.s32.totalorder %s30, 0
      %p377 = por %p375, %p376
      %s379 = sadd.s32 %s378, 1
      %p382 = scmp.eq.s32.totalorder %s24, 7
      %p383 = scmp.ne.s32.totalorder %s378, %s380
      %p384 = scmp.eq.s32.totalorder %s24, 0
      %p385 = por %p383, %p384
      %p386 = scmp.ne.s32.totalorder %s378, %s380
      %p387 = scmp.eq.s32.totalorder %s29, 7
      %p388 = por %p386, %p387
      %p389 = scmp.ne.s32.totalorder %s380, %s381
      %p390 = scmp.eq.s32.totalorder %s29, 0
      %p391 = por %p389, %p390
      %p392 = scmp.ne.s32.totalorder %s380, %s381
      %p393 = scmp.eq.s32.totalorder %s30, 7
      %p394 = por %p392, %p393
      %p396 = scmp.ne.s32.totalorder %s381, %s395
      %p397 = scmp.eq.s32.totalorder %s30, 0
      %p398 = por %p396, %p397
      %s399 = ssub.s32 %s31, %s43
      %p400 = scmp.eq.s32.totalorder %s399, 0
      %s402 = sadd.s32 %s401, 1
      %s403 = scalar_select %p400, %s401, %s402
      %p406 = pneg %p400
      %p407 = scmp.eq.s32.totalorder %s24, 7
      %p408 = por %p406, %p407
      %p409 = scmp.ne.s32.totalorder %s401, %s404
      %p410 = scmp.eq.s32.totalorder %s24, 0
      %p411 = por %p409, %p410
      %p412 = scmp.ne.s32.totalorder %s401, %s404
      %p413 = scmp.eq.s32.totalorder %s29, 7
      %p414 = por %p412, %p413
      %p415 = scmp.ne.s32.totalorder %s404, %s405
      %p416 = scmp.eq.s32.totalorder %s29, 0
      %p417 = por %p415, %p416
      %p418 = scmp.ne.s32.totalorder %s404, %s405
      %p419 = scmp.eq.s32.totalorder %s30, 7
      %p420 = por %p418, %p419
      %p422 = scmp.ne.s32.totalorder %s405, %s421
      %p423 = scmp.eq.s32.totalorder %s30, 0
      %p424 = por %p422, %p423
      %p425 = scmp.le.s32.totalorder 1, %s24
      %p426 = scmp.lt.s32.totalorder %s24, 9
      %p427 = pnand %p425, %p426
      %p428 = pneg %p427
      // Predicated region
      $region9: #{tpu_custom_call.1} parent=5 // pred_check
        _
      $region10: #{tpu_custom_call.1} parent=5 // pred_check_branch
        %430 = sbr.rel (%p427) target = $region12
      $region11: #{tpu_custom_call.1} parent=5 // pred_region
        %s431 = ssub.s32 %s24, 1
        // Predicated region
        $region13: #{tpu_custom_call.1} parent=11 // pred_check
          %p432 = pneg %p265
        $region14: #{tpu_custom_call.1} parent=11 // pred_check_branch
          %434 = sbr.rel (%p432) target = $region16
        $region15: #{tpu_custom_call.1} parent=11 // pred_region
          _
        $region16: #{tpu_custom_call.1} parent=11 // pred_fallthru
          _
        // Predicated region
        $region17: #{tpu_custom_call.1} parent=11 // pred_check
          %p435 = pneg %p286
        $region18: #{tpu_custom_call.1} parent=11 // pred_check_branch
          %437 = sbr.rel (%p435) target = $region20
        $region19: #{tpu_custom_call.1} parent=11 // pred_region
          _
        $region20: #{tpu_custom_call.1} parent=11 // pred_fallthru
          _
        // Predicated region
        $region21: #{tpu_custom_call.1} parent=11 // pred_check
          %p438 = pneg %p307
        $region22: #{tpu_custom_call.1} parent=11 // pred_check_branch
          %440 = sbr.rel (%p438) target = $region24
        $region23: #{tpu_custom_call.1} parent=11 // pred_region
          _
        $region24: #{tpu_custom_call.1} parent=11 // pred_fallthru
          _
        // Predicated region
        $region25: #{tpu_custom_call.1} parent=11 // pred_check
          %p441 = pneg %p328
        $region26: #{tpu_custom_call.1} parent=11 // pred_check_branch
          %443 = sbr.rel (%p441) target = $region28
        $region27: #{tpu_custom_call.1} parent=11 // pred_region
          _
        $region28: #{tpu_custom_call.1} parent=11 // pred_fallthru
          _
        // Predicated region
        $region29: #{tpu_custom_call.1} parent=11 // pred_check
          %p444 = pneg %p349
        $region30: #{tpu_custom_call.1} parent=11 // pred_check_branch
          %446 = sbr.rel (%p444) target = $region32
        $region31: #{tpu_custom_call.1} parent=11 // pred_region
          _
        $region32: #{tpu_custom_call.1} parent=11 // pred_fallthru
          _
        // Predicated region
        $region33: #{tpu_custom_call.1} parent=11 // pred_check
          %p447 = pneg %p370
        $region34: #{tpu_custom_call.1} parent=11 // pred_check_branch
          %449 = sbr.rel (%p447) target = $region36
        $region35: #{tpu_custom_call.1} parent=11 // pred_region
          _
        $region36: #{tpu_custom_call.1} parent=11 // pred_fallthru
          _
        // Predicated region
        $region37: #{tpu_custom_call.1} parent=11 // pred_check
          %p450 = pneg %p391
        $region38: #{tpu_custom_call.1} parent=11 // pred_check_branch
          %452 = sbr.rel (%p450) target = $region40
        $region39: #{tpu_custom_call.1} parent=11 // pred_region
          _
        $region40: #{tpu_custom_call.1} parent=11 // pred_fallthru
          _
      $region12: #{tpu_custom_call.1} parent=5 // pred_fallthru
        _
      %p453 = scmp.lt.s32.totalorder %s24, 8
      // Predicated region
      $region41: #{tpu_custom_call.1} parent=5 // pred_check
        %p454 = pneg %p453
      $region42: #{tpu_custom_call.1} parent=5 // pred_check_branch
        %456 = sbr.rel (%p454) target = $region44
      $region43: #{tpu_custom_call.1} parent=5 // pred_region
        // Predicated region
        $region45: #{tpu_custom_call.1} parent=43 // pred_check
          %p457 = pneg %p56
        $region46: #{tpu_custom_call.1} parent=43 // pred_check_branch
          %459 = sbr.rel (%p457) target = $region48
        $region47: #{tpu_custom_call.1} parent=43 // pred_region
          %p460 = scmp.lt.s32.totalorder %s31, 1
          %s461 = scalar_select %p460, %s31, 1
          %s462 = smul.addr %s461, 2
          %s463 = smul.addr %s462, 8
          %s464 = scalar_lea.vmem %s0, %s463
        $region48: #{tpu_custom_call.1} parent=43 // pred_fallthru
          _
        // Predicated region
        $region49: #{tpu_custom_call.1} parent=43 // pred_check
          %p465 = pneg %p82
        $region50: #{tpu_custom_call.1} parent=43 // pred_check_branch
          %467 = sbr.rel (%p465) target = $region52
        $region51: #{tpu_custom_call.1} parent=43 // pred_region
          %p468 = scmp.lt.s32.totalorder %s32, 3
          %s469 = scalar_select %p468, %s32, 3
          %s470 = smul.addr %s469, 16
          %s471 = smul.addr %s470, 4
          %s472 = scalar_lea.vmem %s1, %s471
        $region52: #{tpu_custom_call.1} parent=43 // pred_fallthru
          _
        // Predicated region
        $region53: #{tpu_custom_call.1} parent=43 // pred_check
          %p473 = pneg %p108
        $region54: #{tpu_custom_call.1} parent=43 // pred_check_branch
          %475 = sbr.rel (%p473) target = $region56
        $region55: #{tpu_custom_call.1} parent=43 // pred_region
          %p476 = scmp.lt.s32.totalorder %s32, 3
          %s477 = scalar_select %p476, %s32, 3
          %s478 = scalar_lea.vmem %s2, %s477
        $region56: #{tpu_custom_call.1} parent=43 // pred_fallthru
          _
        // Predicated region
        $region57: #{tpu_custom_call.1} parent=43 // pred_check
          %p479 = pneg %p134
        $region58: #{tpu_custom_call.1} parent=43 // pred_check_branch
          %481 = sbr.rel (%p479) target = $region60
        $region59: #{tpu_custom_call.1} parent=43 // pred_region
          %p482 = scmp.lt.s32.totalorder %s32, 3
          %s483 = scalar_select %p482, %s32, 3
          %s484 = smul.addr %s483, 16
          %s485 = smul.addr %s484, 4
          %s486 = scalar_lea.vmem %s3, %s485
        $region60: #{tpu_custom_call.1} parent=43 // pred_fallthru
          _
        // Predicated region
        $region61: #{tpu_custom_call.1} parent=43 // pred_check
          %p487 = pneg %p160
        $region62: #{tpu_custom_call.1} parent=43 // pred_check_branch
          %489 = sbr.rel (%p487) target = $region64
        $region63: #{tpu_custom_call.1} parent=43 // pred_region
          %p490 = scmp.lt.s32.totalorder %s32, 3
          %s491 = scalar_select %p490, %s32, 3
          %s492 = scalar_lea.vmem %s4, %s491
        $region64: #{tpu_custom_call.1} parent=43 // pred_fallthru
          _
        // Predicated region
        $region65: #{tpu_custom_call.1} parent=43 // pred_check
          %p493 = pneg %p186
        $region66: #{tpu_custom_call.1} parent=43 // pred_check_branch
          %495 = sbr.rel (%p493) target = $region68
        $region67: #{tpu_custom_call.1} parent=43 // pred_region
          %p496 = scmp.lt.s32.totalorder %s32, 3
          %s497 = scalar_select %p496, %s32, 3
          %s498 = smul.addr %s497, 16
          %s499 = smul.addr %s498, 4
          %s500 = scalar_lea.vmem %s5, %s499
        $region68: #{tpu_custom_call.1} parent=43 // pred_fallthru
          _
        // Predicated region
        $region69: #{tpu_custom_call.1} parent=43 // pred_check
          %p501 = pneg %p212
        $region70: #{tpu_custom_call.1} parent=43 // pred_check_branch
          %503 = sbr.rel (%p501) target = $region72
        $region71: #{tpu_custom_call.1} parent=43 // pred_region
          %p504 = scmp.lt.s32.totalorder %s32, 3
          %s505 = scalar_select %p504, %s32, 3
          %s506 = scalar_lea.vmem %s6, %s505
        $region72: #{tpu_custom_call.1} parent=43 // pred_fallthru
          _
        // Predicated region
        $region73: #{tpu_custom_call.1} parent=43 // pred_check
          %p507 = pneg %p238
        $region74: #{tpu_custom_call.1} parent=43 // pred_check_branch
          %509 = sbr.rel (%p507) target = $region76
        $region75: #{tpu_custom_call.1} parent=43 // pred_region
          %s510 = smul.u32 4, %s32
          %p511 = scmp.lt.s32.totalorder %s510, 15
          %s512 = scalar_select %p511, %s510, 15
          %s513 = smul.addr %s512, 4
          %s514 = scalar_lea.vmem %s7, %s513
          %s515 = smul.u32 4, %s32
        $region76: #{tpu_custom_call.1} parent=43 // pred_fallthru
          _
      $region44: #{tpu_custom_call.1} parent=5 // pred_fallthru
        _
      %p516 = scmp.le.s32.totalorder 1, %s24
      %p517 = scmp.lt.s32.totalorder %s24, 9
      %p518 = pnand %p516, %p517
      %p519 = pneg %p518
      // Predicated region
      $region77: #{tpu_custom_call.1} parent=5 // pred_check
        _
      $region78: #{tpu_custom_call.1} parent=5 // pred_check_branch
        %521 = sbr.rel (%p518) target = $region80
      $region79: #{tpu_custom_call.1} parent=5 // pred_region
        %s522 = ssub.s32 %s24, 1
        %p523 = scmp.lt.s32.totalorder %s33, 1
        %s524 = scalar_select %p523, %s33, 1
        %s525 = smul.addr %s524, 2
        %s526 = smul.addr %s525, 8
        %s527 = scalar_lea.vmem %s0, %s526
        %p528 = pneg %p62
        %p529 = pneg %p59
        %p530 = scmp.lt.s32.totalorder %s34, 3
        %s531 = scalar_select %p530, %s34, 3
        %s532 = smul.addr %s531, 16
        %s533 = smul.addr %s532, 4
        %s534 = scalar_lea.vmem %s1, %s533
        %p535 = pneg %p88
        %p536 = pneg %p85
        %p537 = scmp.lt.s32.totalorder %s34, 3
        %s538 = scalar_select %p537, %s34, 3
        %s539 = scalar_lea.vmem %s2, %s538
        %p540 = pneg %p114
        %p541 = pneg %p111
        %p542 = scmp.lt.s32.totalorder %s34, 3
        %s543 = scalar_select %p542, %s34, 3
        %s544 = smul.addr %s543, 16
        %s545 = smul.addr %s544, 4
        %s546 = scalar_lea.vmem %s3, %s545
        %p547 = pneg %p140
        %p548 = pneg %p137
        %p549 = scmp.lt.s32.totalorder %s34, 3
        %s550 = scalar_select %p549, %s34, 3
        %s551 = scalar_lea.vmem %s4, %s550
        %p552 = pneg %p166
        %p553 = pneg %p163
        %p554 = scmp.lt.s32.totalorder %s34, 3
        %s555 = scalar_select %p554, %s34, 3
        %s556 = smul.addr %s555, 16
        %s557 = smul.addr %s556, 4
        %s558 = scalar_lea.vmem %s5, %s557
        %p559 = pneg %p192
        %p560 = pneg %p189
        %p561 = scmp.lt.s32.totalorder %s34, 3
        %s562 = scalar_select %p561, %s34, 3
        %s563 = scalar_lea.vmem %s6, %s562
        %p564 = pneg %p218
        %p565 = pneg %p215
        %s566 = smul.u32 4, %s34
        %p567 = scmp.lt.s32.totalorder %s566, 15
        %s568 = scalar_select %p567, %s566, 15
        %s569 = smul.addr %s568, 4
        %s570 = scalar_lea.vmem %s7, %s569
        %p571 = pneg %p244
        %p572 = pneg %p241
        %p573 = pneg %p265
        %p574 = pneg %p262
        %p575 = pneg %p286
        %p576 = pneg %p283
        %p577 = pneg %p307
        %p578 = pneg %p304
        %p579 = pneg %p328
        %p580 = pneg %p325
        %p581 = pneg %p349
        %p582 = pneg %p346
        %p583 = pneg %p370
        %p584 = pneg %p367
        %p585 = pneg %p391
        %p586 = pneg %p388
        %p587 = pneg %p417
        %p588 = pneg %p414
        %s589 = sand.u32 %s404, 1
        %s590 = scalar_lea.sflag [#allocation4], %s589
        %s591 = sand.u32 %s404, 1
        %s592 = smul.addr %s591, 16
        %s593 = scalar_lea.vmem [#allocation3], %s592
        %p594 = scmp.lt.s32.totalorder %s33, 1
        %s595 = scalar_select %p594, %s33, 1
        %s596 = smul.addr %s595, 2
        %s597 = smul.addr %s596, 8
        %s598 = scalar_lea.vmem %s0, %s597
        %p599 = scmp.lt.s32.totalorder %s34, 3
        %s600 = scalar_select %p599, %s34, 3
        %s601 = smul.addr %s600, 16
        %s602 = smul.addr %s601, 4
        %s603 = scalar_lea.vmem %s1, %s602
        %p604 = scmp.lt.s32.totalorder %s34, 3
        %s605 = scalar_select %p604, %s34, 3
        %s606 = scalar_lea.vmem %s2, %s605
        %p607 = scmp.lt.s32.totalorder %s34, 3
        %s608 = scalar_select %p607, %s34, 3
        %s609 = smul.addr %s608, 16
        %s610 = smul.addr %s609, 4
        %s611 = scalar_lea.vmem %s3, %s610
        %p612 = scmp.lt.s32.totalorder %s34, 3
        %s613 = scalar_select %p612, %s34, 3
        %s614 = scalar_lea.vmem %s4, %s613
        %p615 = scmp.lt.s32.totalorder %s34, 3
        %s616 = scalar_select %p615, %s34, 3
        %s617 = smul.addr %s616, 16
        %s618 = smul.addr %s617, 4
        %s619 = scalar_lea.vmem %s5, %s618
        %p620 = scmp.lt.s32.totalorder %s34, 3
        %s621 = scalar_select %p620, %s34, 3
        %s622 = scalar_lea.vmem %s6, %s621
        %s623 = smul.u32 4, %s34
        %p624 = scmp.lt.s32.totalorder %s623, 15
        %s625 = scalar_select %p624, %s623, 15
        %s626 = smul.addr %s625, 4
        %s627 = scalar_lea.vmem %s7, %s626
        %s628 = smul.u32 4, %s34
        %v630 = vld [vmem:[%s598] sm:$0xff]
        %v631 = vld [vmem:[%s598 + $0x8] sm:$0xff]
        %v632 = vpack.c.bf16 %v631, %v630
        %v633 = vld [vmem:[%s603] sm:$0xf]
        %v634 = vld [vmem:[%s603 + $0x4] sm:$0xf]
        %v635 = vld [vmem:[%s603 + $0x8] sm:$0xf]
        %v636 = vld [vmem:[%s603 + $0xc] sm:$0xf]
        %v637 = vld [vmem:[%s603 + $0x10] sm:$0xf]
        %v638 = vld [vmem:[%s603 + $0x14] sm:$0xf]
        %v639 = vld [vmem:[%s603 + $0x18] sm:$0xf]
        %v640 = vld [vmem:[%s603 + $0x1c] sm:$0xf]
        %v641 = vld [vmem:[%s603 + $0x20] sm:$0xf]
        %v642 = vld [vmem:[%s603 + $0x24] sm:$0xf]
        %v643 = vld [vmem:[%s603 + $0x28] sm:$0xf]
        %v644 = vld [vmem:[%s603 + $0x2c] sm:$0xf]
        %v645 = vld [vmem:[%s603 + $0x30] sm:$0xf]
        %v646 = vld [vmem:[%s603 + $0x34] sm:$0xf]
        %v647 = vld [vmem:[%s603 + $0x38] sm:$0xf]
        %v648 = vld [vmem:[%s603 + $0x3c] sm:$0xf]
        %v649 = vld [vmem:[%s611] sm:$0xf]
        %v650 = vld [vmem:[%s611 + $0x4] sm:$0xf]
        %v651 = vld [vmem:[%s611 + $0x8] sm:$0xf]
        %v652 = vld [vmem:[%s611 + $0xc] sm:$0xf]
        %v653 = vld [vmem:[%s611 + $0x10] sm:$0xf]
        %v654 = vld [vmem:[%s611 + $0x14] sm:$0xf]
        %v655 = vld [vmem:[%s611 + $0x18] sm:$0xf]
        %v656 = vld [vmem:[%s611 + $0x1c] sm:$0xf]
        %v657 = vld [vmem:[%s611 + $0x20] sm:$0xf]
        %v658 = vld [vmem:[%s611 + $0x24] sm:$0xf]
        %v659 = vld [vmem:[%s611 + $0x28] sm:$0xf]
        %v660 = vld [vmem:[%s611 + $0x2c] sm:$0xf]
        %v661 = vld [vmem:[%s611 + $0x30] sm:$0xf]
        %v662 = vld [vmem:[%s611 + $0x34] sm:$0xf]
        %v663 = vld [vmem:[%s611 + $0x38] sm:$0xf]
        %v664 = vld [vmem:[%s611 + $0x3c] sm:$0xf]
        %v665 = vld [vmem:[%s619] sm:$0xf]
        %v666 = vld [vmem:[%s619 + $0x4] sm:$0xf]
        %v667 = vld [vmem:[%s619 + $0x8] sm:$0xf]
        %v668 = vld [vmem:[%s619 + $0xc] sm:$0xf]
        %v669 = vld [vmem:[%s619 + $0x10] sm:$0xf]
        %v670 = vld [vmem:[%s619 + $0x14] sm:$0xf]
        %v671 = vld [vmem:[%s619 + $0x18] sm:$0xf]
        %v672 = vld [vmem:[%s619 + $0x1c] sm:$0xf]
        %v673 = vld [vmem:[%s619 + $0x20] sm:$0xf]
        %v674 = vld [vmem:[%s619 + $0x24] sm:$0xf]
        %v675 = vld [vmem:[%s619 + $0x28] sm:$0xf]
        %v676 = vld [vmem:[%s619 + $0x2c] sm:$0xf]
        %v677 = vld [vmem:[%s619 + $0x30] sm:$0xf]
        %v678 = vld [vmem:[%s619 + $0x34] sm:$0xf]
        %v679 = vld [vmem:[%s619 + $0x38] sm:$0xf]
        %v680 = vld [vmem:[%s619 + $0x3c] sm:$0xf]
        %v681 = vld [vmem:[%s606] sm:$0x1]
        %v683 = vlaneseq
        %v684 = vshrl.u32 %v683, 7
        %v685 = vsub.s32 0, %v684
        %v686 = vrot.slane %v681, %v685
        %v704 = vunpack.c.l.b16 %v633
        %v705 = vunpack.c.l.b16 %v634
        %v706 = vunpack.c.l.b16 %v635
        %v707 = vunpack.c.l.b16 %v636
        %v708 = vunpack.c.l.b16 %v637
        %v709 = vunpack.c.l.b16 %v638
        %v710 = vunpack.c.l.b16 %v639
        %v711 = vunpack.c.l.b16 %v640
        %v712 = vunpack.c.l.b16 %v641
        %v713 = vunpack.c.l.b16 %v642
        %v714 = vunpack.c.l.b16 %v643
        %v715 = vunpack.c.l.b16 %v644
        %v716 = vunpack.c.l.b16 %v645
        %v717 = vunpack.c.l.b16 %v646
        %v718 = vunpack.c.l.b16 %v647
        %v719 = vunpack.c.l.b16 %v648
        %v720 = vpack.c.b16 %v705, %v704
        %v721 = vpack.c.b16 %v707, %v706
        %v722 = vpack.c.b16 %v709, %v708
        %v723 = vpack.c.b16 %v711, %v710
        %v724 = vpack.c.b16 %v713, %v712
        %v725 = vpack.c.b16 %v715, %v714
        %v726 = vpack.c.b16 %v717, %v716
        %v727 = vpack.c.b16 %v719, %v718
        %736 = vmatprep.subr.bf16.mxu0 0
        %737 = vmatpush1.bf16.msra.mxu0 %v727
        %738 = vmatprep.subr.bf16.mxu0 0
        %739 = vmatpush1.bf16.msra.mxu0 %v726
        %740 = vmatprep.subr.bf16.mxu0 0
        %741 = vmatpush1.bf16.msra.mxu0 %v725
        %742 = vmatprep.subr.bf16.mxu0 0
        %743 = vmatpush1.bf16.msra.mxu0 %v724
        %744 = vmatprep.subr.bf16.mxu0 0
        %745 = vmatpush1.bf16.msra.mxu0 %v723
        %746 = vmatprep.subr.bf16.mxu0 0
        %747 = vmatpush1.bf16.msra.mxu0 %v722
        %748 = vmatprep.subr.bf16.mxu0 0
        %749 = vmatpush1.bf16.msra.mxu0 %v721
        %750 = vmatprep.subr.bf16.mxu0 0
        %751 = vmatpush1.bf16.msra.mxu0 %v720
        %752 = vmatprep.subr.bf16.mxu0 0
        %753 = vmatpush2.bf16.msra.mxu0 0
        %754 = vmatprep.subr.bf16.mxu0 0
        %755 = vmatpush2.bf16.msra.mxu0 0
        %756 = vmatprep.subr.bf16.mxu0 0
        %757 = vmatpush2.bf16.msra.mxu0 0
        %758 = vmatprep.subr.bf16.mxu0 0
        %759 = vmatpush2.bf16.msra.mxu0 0
        %760 = vmatprep.subr.bf16.mxu0 0
        %761 = vmatpush2.bf16.msra.mxu0 0
        %762 = vmatprep.subr.bf16.mxu0 0
        %763 = vmatpush2.bf16.msra.mxu0 0
        %764 = vmatprep.subr.bf16.mxu0 0
        %765 = vmatpush2.bf16.msra.mxu0 0
        %766 = vmatprep.subr.bf16.mxu0 0
        %767 = vmatpush2.bf16.msra.mxu0 0
        %768 = vmatprep.mubr.bf16.mxu0 0
        %769 = vmatmul.mubr.bf16.gmra.mxu0 %v632
        %v770 = vpop.f32.mrf.mxu0
        %v771 = vadd.f32 %v686, %v770
        %v772 = vpop.f32.mrf.mxu0
        %v773 = vpop.f32.mrf.mxu0
        %v774 = vadd.f32 %v686, %v773
        %v775 = vpop.f32.mrf.mxu0
        %776 = vdwg.mxu0
        %v777 = vld [vmem:[%s614] sm:$0x1]
        %v779 = vlaneseq
        %v780 = vshrl.u32 %v779, 7
        %v781 = vsub.s32 0, %v780
        %v782 = vrot.slane %v777, %v781
        %v800 = vunpack.c.l.b16 %v649
        %v801 = vunpack.c.l.b16 %v650
        %v802 = vunpack.c.l.b16 %v651
        %v803 = vunpack.c.l.b16 %v652
        %v804 = vunpack.c.l.b16 %v653
        %v805 = vunpack.c.l.b16 %v654
        %v806 = vunpack.c.l.b16 %v655
        %v807 = vunpack.c.l.b16 %v656
        %v808 = vunpack.c.l.b16 %v657
        %v809 = vunpack.c.l.b16 %v658
        %v810 = vunpack.c.l.b16 %v659
        %v811 = vunpack.c.l.b16 %v660
        %v812 = vunpack.c.l.b16 %v661
        %v813 = vunpack.c.l.b16 %v662
        %v814 = vunpack.c.l.b16 %v663
        %v815 = vunpack.c.l.b16 %v664
        %v816 = vpack.c.b16 %v801, %v800
        %v817 = vpack.c.b16 %v803, %v802
        %v818 = vpack.c.b16 %v805, %v804
        %v819 = vpack.c.b16 %v807, %v806
        %v820 = vpack.c.b16 %v809, %v808
        %v821 = vpack.c.b16 %v811, %v810
        %v822 = vpack.c.b16 %v813, %v812
        %v823 = vpack.c.b16 %v815, %v814
        %832 = vmatprep.subr.bf16.mxu0 0
        %833 = vmatpush1.bf16.msra.mxu0 %v823
        %834 = vmatprep.subr.bf16.mxu0 0
        %835 = vmatpush1.bf16.msra.mxu0 %v822
        %836 = vmatprep.subr.bf16.mxu0 0
        %837 = vmatpush1.bf16.msra.mxu0 %v821
        %838 = vmatprep.subr.bf16.mxu0 0
        %839 = vmatpush1.bf16.msra.mxu0 %v820
        %840 = vmatprep.subr.bf16.mxu0 0
        %841 = vmatpush1.bf16.msra.mxu0 %v819
        %842 = vmatprep.subr.bf16.mxu0 0
        %843 = vmatpush1.bf16.msra.mxu0 %v818
        %844 = vmatprep.subr.bf16.mxu0 0
        %845 = vmatpush1.bf16.msra.mxu0 %v817
        %846 = vmatprep.subr.bf16.mxu0 0
        %847 = vmatpush1.bf16.msra.mxu0 %v816
        %848 = vmatprep.subr.bf16.mxu0 0
        %849 = vmatpush2.bf16.msra.mxu0 0
        %850 = vmatprep.subr.bf16.mxu0 0
        %851 = vmatpush2.bf16.msra.mxu0 0
        %852 = vmatprep.subr.bf16.mxu0 0
        %853 = vmatpush2.bf16.msra.mxu0 0
        %854 = vmatprep.subr.bf16.mxu0 0
        %855 = vmatpush2.bf16.msra.mxu0 0
        %856 = vmatprep.subr.bf16.mxu0 0
        %857 = vmatpush2.bf16.msra.mxu0 0
        %858 = vmatprep.subr.bf16.mxu0 0
        %859 = vmatpush2.bf16.msra.mxu0 0
        %860 = vmatprep.subr.bf16.mxu0 0
        %861 = vmatpush2.bf16.msra.mxu0 0
        %862 = vmatprep.subr.bf16.mxu0 0
        %863 = vmatpush2.bf16.msra.mxu0 0
        %864 = vmatprep.mubr.bf16.mxu0 0
        %865 = vmatmul.mubr.bf16.gmra.mxu0 %v632
        %v866 = vpop.f32.mrf.mxu0
        %v867 = vadd.f32 %v782, %v866
        %v868 = vpop.f32.mrf.mxu0
        %v869 = vpop.f32.mrf.mxu0
        %v870 = vadd.f32 %v782, %v869
        %v871 = vpop.f32.mrf.mxu0
        %872 = vdwg.mxu0
        %v873 = vld [vmem:[%s622] sm:$0x1]
        %v875 = vlaneseq
        %v876 = vshrl.u32 %v875, 7
        %v877 = vsub.s32 0, %v876
        %v878 = vrot.slane %v873, %v877
        %v896 = vunpack.c.l.b16 %v665
        %v897 = vunpack.c.l.b16 %v666
        %v898 = vunpack.c.l.b16 %v667
        %v899 = vunpack.c.l.b16 %v668
        %v900 = vunpack.c.l.b16 %v669
        %v901 = vunpack.c.l.b16 %v670
        %v902 = vunpack.c.l.b16 %v671
        %v903 = vunpack.c.l.b16 %v672
        %v904 = vunpack.c.l.b16 %v673
        %v905 = vunpack.c.l.b16 %v674
        %v906 = vunpack.c.l.b16 %v675
        %v907 = vunpack.c.l.b16 %v676
        %v908 = vunpack.c.l.b16 %v677
        %v909 = vunpack.c.l.b16 %v678
        %v910 = vunpack.c.l.b16 %v679
        %v911 = vunpack.c.l.b16 %v680
        %v912 = vpack.c.b16 %v897, %v896
        %v913 = vpack.c.b16 %v899, %v898
        %v914 = vpack.c.b16 %v901, %v900
        %v915 = vpack.c.b16 %v903, %v902
        %v916 = vpack.c.b16 %v905, %v904
        %v917 = vpack.c.b16 %v907, %v906
        %v918 = vpack.c.b16 %v909, %v908
        %v919 = vpack.c.b16 %v911, %v910
        %928 = vmatprep.subr.bf16.mxu0 0
        %929 = vmatpush1.bf16.msra.mxu0 %v919
        %930 = vmatprep.subr.bf16.mxu0 0
        %931 = vmatpush1.bf16.msra.mxu0 %v918
        %932 = vmatprep.subr.bf16.mxu0 0
        %933 = vmatpush1.bf16.msra.mxu0 %v917
        %934 = vmatprep.subr.bf16.mxu0 0
        %935 = vmatpush1.bf16.msra.mxu0 %v916
        %936 = vmatprep.subr.bf16.mxu0 0
        %937 = vmatpush1.bf16.msra.mxu0 %v915
        %938 = vmatprep.subr.bf16.mxu0 0
        %939 = vmatpush1.bf16.msra.mxu0 %v914
        %940 = vmatprep.subr.bf16.mxu0 0
        %941 = vmatpush1.bf16.msra.mxu0 %v913
        %942 = vmatprep.subr.bf16.mxu0 0
        %943 = vmatpush1.bf16.msra.mxu0 %v912
        %944 = vmatprep.subr.bf16.mxu0 0
        %945 = vmatpush2.bf16.msra.mxu0 0
        %946 = vmatprep.subr.bf16.mxu0 0
        %947 = vmatpush2.bf16.msra.mxu0 0
        %948 = vmatprep.subr.bf16.mxu0 0
        %949 = vmatpush2.bf16.msra.mxu0 0
        %950 = vmatprep.subr.bf16.mxu0 0
        %951 = vmatpush2.bf16.msra.mxu0 0
        %952 = vmatprep.subr.bf16.mxu0 0
        %953 = vmatpush2.bf16.msra.mxu0 0
        %954 = vmatprep.subr.bf16.mxu0 0
        %955 = vmatpush2.bf16.msra.mxu0 0
        %956 = vmatprep.subr.bf16.mxu0 0
        %957 = vmatpush2.bf16.msra.mxu0 0
        %958 = vmatprep.subr.bf16.mxu0 0
        %959 = vmatpush2.bf16.msra.mxu0 0
        %960 = vmatprep.mubr.bf16.mxu0 0
        %961 = vmatmul.mubr.bf16.gmra.mxu0 %v632
        %v962 = vpop.f32.mrf.mxu0
        %v963 = vadd.f32 %v878, %v962
        %v964 = vpop.f32.mrf.mxu0
        %v965 = vpop.f32.mrf.mxu0
        %v966 = vadd.f32 %v878, %v965
        %v967 = vpop.f32.mrf.mxu0
        %968 = vdwg.mxu0
        %v969 = vpack.c.bf16 %v774, %v771
        %v970 = vpack.c.bf16 %v870, %v867
        %vm971 = vcmask 261120
        %v973 = vsel %vm971, %v969, 0
        %v976 = vsel %vm971, %v970, 0
        %978 = vmatprep.subr.bf16.mxu0 0
        %979 = vmatpush1.bf16.xpose.msra.mxu0 0
        %980 = vmatprep.subr.bf16.mxu0 0
        %981 = vmatpush1.bf16.xpose.msra.mxu0 0
        %982 = vmatprep.subr.bf16.mxu0 0
        %983 = vmatpush1.bf16.xpose.msra.mxu0 0
        %984 = vmatprep.subr.bf16.mxu0 0
        %985 = vmatpush1.bf16.xpose.msra.mxu0 0
        %986 = vmatprep.subr.bf16.mxu0 0
        %987 = vmatpush1.bf16.xpose.msra.mxu0 0
        %988 = vmatprep.subr.bf16.mxu0 0
        %989 = vmatpush1.bf16.xpose.msra.mxu0 0
        %990 = vmatprep.subr.bf16.mxu0 0
        %991 = vmatpush1.bf16.xpose.msra.mxu0 0
        %992 = vmatprep.subr.bf16.mxu0 0
        %993 = vmatpush1.bf16.xpose.msra.mxu0 %v976
        %994 = vmatprep.subr.bf16.mxu0 0
        %995 = vmatpush2.bf16.xpose.msra.mxu0 0
        %996 = vmatprep.subr.bf16.mxu0 0
        %997 = vmatpush2.bf16.xpose.msra.mxu0 0
        %998 = vmatprep.subr.bf16.mxu0 0
        %999 = vmatpush2.bf16.xpose.msra.mxu0 0
        %1000 = vmatprep.subr.bf16.mxu0 0
        %1001 = vmatpush2.bf16.xpose.msra.mxu0 0
        %1002 = vmatprep.subr.bf16.mxu0 0
        %1003 = vmatpush2.bf16.xpose.msra.mxu0 0
        %1004 = vmatprep.subr.bf16.mxu0 0
        %1005 = vmatpush2.bf16.xpose.msra.mxu0 0
        %1006 = vmatprep.subr.bf16.mxu0 0
        %1007 = vmatpush2.bf16.xpose.msra.mxu0 0
        %1008 = vmatprep.subr.bf16.mxu0 0
        %1009 = vmatpush2.bf16.xpose.msra.mxu0 0
        %1010 = vmatprep.mubr.bf16.mxu0 0
        %1011 = vmatmul.mubr.bf16.gmra.mxu0 %v973
        %v1012 = vpop.f32.mrf.mxu0
        %v1013 = vadd.f32 0.0, %v1012
        %v1014 = vpop.f32.mrf.mxu0
        %v1015 = vpop.f32.mrf.mxu0
        %v1016 = vadd.f32 0.0, %v1015
        %v1017 = vpop.f32.mrf.mxu0
        %1018 = vdwg.mxu0
        %v1019 = vmul.f32 %v1013, 0.17677669
        %v1020 = vmul.f32 %v1016, 0.17677669
        %vm1021 = vcmask 130048
        %v1022 = vsel %vm1021, %v1019, -inf
        %1023 = vmax.xlane.f32.xlu0 %v1022
        %v1024 = vpop.xlane.xlu0 %1023
        %v1025 = vsel %vm1021, %v1020, -inf
        %1026 = vmax.xlane.f32.xlu0 %v1025
        %v1027 = vpop.xlane.xlu0 %1026
        %v1028 = vsub.f32 %v1019, %v1024
        %v1029 = vsub.f32 %v1020, %v1027
        %v1030 = vmul.f32 %v1028, 1.442695
        %v1031 = vpow.pop %v1030
        %v1032 = vmul.f32 %v1029, 1.442695
        %v1033 = vpow.pop %v1032
        %v1034 = vsel %vm1021, %v1031, 0.0
        %1035 = vadd.xlane.f32.xlu0 %v1034
        %v1036 = vpop.xlane.xlu0 %1035
        %v1037 = vsel %vm1021, %v1033, 0.0
        %1038 = vadd.xlane.f32.xlu0 %v1037
        %v1039 = vpop.xlane.xlu0 %1038
        %v1040 = vrcp.pop %v1036
        %v1041 = vrcp.pop %v1039
        %v1042 = vmul.f32 %v1031, %v1040
        %v1043 = vmul.f32 %v1033, %v1041
        %v1044 = vpack.c.bf16 %v1043, %v1042
        %v1045 = vpack.c.bf16 %v966, %v963
        %v1047 = vsel %vm1021, %v1044, 0
        %1049 = vmatprep.subr.bf16.mxu0 0
        %1050 = vmatpush1.bf16.msra.mxu0 0
        %1051 = vmatprep.subr.bf16.mxu0 0
        %1052 = vmatpush1.bf16.msra.mxu0 0
        %1053 = vmatprep.subr.bf16.mxu0 0
        %1054 = vmatpush1.bf16.msra.mxu0 0
        %1055 = vmatprep.subr.bf16.mxu0 0
        %1056 = vmatpush1.bf16.msra.mxu0 0
        %1057 = vmatprep.subr.bf16.mxu0 0
        %1058 = vmatpush1.bf16.msra.mxu0 0
        %1059 = vmatprep.subr.bf16.mxu0 0
        %1060 = vmatpush1.bf16.msra.mxu0 0
        %1061 = vmatprep.subr.bf16.mxu0 0
        %1062 = vmatpush1.bf16.msra.mxu0 0
        %1063 = vmatprep.subr.bf16.mxu0 0
        %1064 = vmatpush1.bf16.msra.mxu0 %v1045
        %1065 = vmatprep.subr.bf16.mxu0 0
        %1066 = vmatpush2.bf16.msra.mxu0 0
        %1067 = vmatprep.subr.bf16.mxu0 0
        %1068 = vmatpush2.bf16.msra.mxu0 0
        %1069 = vmatprep.subr.bf16.mxu0 0
        %1070 = vmatpush2.bf16.msra.mxu0 0
        %1071 = vmatprep.subr.bf16.mxu0 0
        %1072 = vmatpush2.bf16.msra.mxu0 0
        %1073 = vmatprep.subr.bf16.mxu0 0
        %1074 = vmatpush2.bf16.msra.mxu0 0
        %1075 = vmatprep.subr.bf16.mxu0 0
        %1076 = vmatpush2.bf16.msra.mxu0 0
        %1077 = vmatprep.subr.bf16.mxu0 0
        %1078 = vmatpush2.bf16.msra.mxu0 0
        %1079 = vmatprep.subr.bf16.mxu0 0
        %1080 = vmatpush2.bf16.msra.mxu0 0
        %1081 = vmatprep.mubr.bf16.mxu0 0
        %1082 = vmatmul.mubr.bf16.gmra.mxu0 %v1047
        %v1083 = vpop.f32.mrf.mxu0
        %v1084 = vadd.f32 0.0, %v1083
        %v1085 = vpop.f32.mrf.mxu0
        %v1086 = vpop.f32.mrf.mxu0
        %v1087 = vadd.f32 0.0, %v1086
        %v1088 = vpop.f32.mrf.mxu0
        %1089 = vdwg.mxu0
        %v1090 = vpack.c.bf16 %v1087, %v1084
        %v1091 = vld [vmem:[%s627] sm:$0xf]
        %v1092 = vld [vmem:[%s627 + $0x4] sm:$0xf]
        %v1093 = vld [vmem:[%s627 + $0x8] sm:$0xf]
        %v1094 = vld [vmem:[%s627 + $0xc] sm:$0xf]
        %v1099 = vunpack.c.l.b16 %v1091
        %v1100 = vunpack.c.l.b16 %v1092
        %v1101 = vunpack.c.l.b16 %v1093
        %v1102 = vunpack.c.l.b16 %v1094
        %v1103 = vpack.c.b16 %v1100, %v1099
        %v1104 = vpack.c.b16 %v1102, %v1101
        %v1108 = vsel %vm971, %v1090, 0
        %1110 = vmatprep.subr.bf16.mxu0 0
        %1111 = vmatpush1.bf16.msra.mxu0 0
        %1112 = vmatprep.subr.bf16.mxu0 0
        %1113 = vmatpush1.bf16.msra.mxu0 0
        %1114 = vmatprep.subr.bf16.mxu0 0
        %1115 = vmatpush1.bf16.msra.mxu0 0
        %1116 = vmatprep.subr.bf16.mxu0 0
        %1117 = vmatpush1.bf16.msra.mxu0 0
        %1118 = vmatprep.subr.bf16.mxu0 0
        %1119 = vmatpush1.bf16.msra.mxu0 0
        %1120 = vmatprep.subr.bf16.mxu0 0
        %1121 = vmatpush1.bf16.msra.mxu0 0
        %1122 = vmatprep.subr.bf16.mxu0 0
        %1123 = vmatpush1.bf16.msra.mxu0 %v1104
        %1124 = vmatprep.subr.bf16.mxu0 0
        %1125 = vmatpush1.bf16.msra.mxu0 %v1103
        %1126 = vmatprep.subr.bf16.mxu0 0
        %1127 = vmatpush2.bf16.msra.mxu0 0
        %1128 = vmatprep.subr.bf16.mxu0 0
        %1129 = vmatpush2.bf16.msra.mxu0 0
        %1130 = vmatprep.subr.bf16.mxu0 0
        %1131 = vmatpush2.bf16.msra.mxu0 0
        %1132 = vmatprep.subr.bf16.mxu0 0
        %1133 = vmatpush2.bf16.msra.mxu0 0
        %1134 = vmatprep.subr.bf16.mxu0 0
        %1135 = vmatpush2.bf16.msra.mxu0 0
        %1136 = vmatprep.subr.bf16.mxu0 0
        %1137 = vmatpush2.bf16.msra.mxu0 0
        %1138 = vmatprep.subr.bf16.mxu0 0
        %1139 = vmatpush2.bf16.msra.mxu0 0
        %1140 = vmatprep.subr.bf16.mxu0 0
        %1141 = vmatpush2.bf16.msra.mxu0 0
        %1142 = vmatprep.mubr.bf16.mxu0 0
        %1143 = vmatmul.mubr.bf16.gmra.mxu0 %v1108
        %v1144 = vpop.f32.mrf.mxu0
        %v1145 = vadd.f32 0.0, %v1144
        %v1146 = vpop.f32.mrf.mxu0
        %v1147 = vpop.f32.mrf.mxu0
        %v1148 = vadd.f32 0.0, %v1147
        %v1149 = vpop.f32.mrf.mxu0
        %1150 = vdwg.mxu0
        %p1151 = scmp.eq.s32.totalorder %s34, 0
        // Predicated region
        $region81: #{tpu_custom_call.1} parent=79 // pred_check
          %p1152 = pneg %p1151
        $region82: #{tpu_custom_call.1} parent=79 // pred_check_branch
          %1154 = sbr.rel (%p1152) target = $region84
        $region83: #{tpu_custom_call.1} parent=79 // pred_region
          %1155 = vst [vmem:[#allocation2] sm:$0xff] 0.0
          %1156 = vst [vmem:[#allocation2 + $0x8] sm:$0xff] 0.0
        $region84: #{tpu_custom_call.1} parent=79 // pred_fallthru
          _
        %v1157 = vld [vmem:[#allocation2] sm:$0xff]
        %v1158 = vld [vmem:[#allocation2 + $0x8] sm:$0xff]
        %v1159 = vadd.f32 %v1157, %v1145
        %v1160 = vadd.f32 %v1158, %v1148
        %1161 = vst [vmem:[#allocation2] sm:$0xff] %v1159
        %1162 = vst [vmem:[#allocation2 + $0x8] sm:$0xff] %v1160
        %p1163 = scmp.eq.s32.totalorder %s34, 3
        // Predicated region
        $region85: #{tpu_custom_call.1} parent=79 // pred_check
          %p1164 = pneg %p1163
        $region86: #{tpu_custom_call.1} parent=79 // pred_check_branch
          %1166 = sbr.rel (%p1164) target = $region88
        $region87: #{tpu_custom_call.1} parent=79 // pred_region
          %v1167 = vld [vmem:[#allocation2] sm:$0xff]
          %v1168 = vld [vmem:[#allocation2 + $0x8] sm:$0xff]
          %v1169 = vld [vmem:[%s8] sm:$0x1]
          %v1171 = vlaneseq
          %v1172 = vshrl.u32 %v1171, 7
          %v1173 = vsub.s32 0, %v1172
          %v1174 = vrot.slane %v1169, %v1173
          %v1176 = vadd.f32 %v1167, %v1174
          %v1177 = vadd.f32 %v1168, %v1174
          %v1178 = vadd.f32 %v630, %v1176
          %v1179 = vadd.f32 %v631, %v1177
          %v1180 = vld [vmem:[%s9] sm:$0x1]
          %v1181 = vld [vmem:[%s10] sm:$0x1]
          %1182 = vadd.xlane.f32.xlu0 %v1178
          %v1183 = vpop.xlane.xlu0 %1182
          %1184 = vadd.xlane.f32.xlu0 %v1179
          %v1185 = vpop.xlane.xlu0 %1184
          %v1186 = vrcp.pop 128.0
          %v1187 = vmul.f32 %v1183, %v1186
          %v1188 = vmul.f32 %v1185, %v1186
          %v1189 = vsub.f32 %v1178, %v1187
          %v1190 = vsub.f32 %v1179, %v1188
          %v1191 = vmul.f32 %v1189, %v1189
          %v1192 = vmul.f32 %v1190, %v1190
          %1193 = vadd.xlane.f32.xlu0 %v1191
          %v1194 = vpop.xlane.xlu0 %1193
          %1195 = vadd.xlane.f32.xlu0 %v1192
          %v1196 = vpop.xlane.xlu0 %1195
          %v1197 = vmul.f32 %v1194, %v1186
          %v1198 = vmul.f32 %v1196, %v1186
          %v1199 = vadd.f32 %v1197, 1e-05
          %v1200 = vadd.f32 %v1198, 1e-05
          %v1201 = vrsqrt.pop %v1199
          %v1202 = vrsqrt.pop %v1200
          %v1203 = vmul.f32 %v1189, %v1201
          %v1204 = vmul.f32 %v1190, %v1202
          %v1206 = vlaneseq
          %v1207 = vshrl.u32 %v1206, 7
          %v1208 = vsub.s32 0, %v1207
          %v1209 = vrot.slane %v1180, %v1208
          %v1211 = vmul.f32 %v1203, %v1209
          %v1212 = vmul.f32 %v1204, %v1209
          %v1214 = vlaneseq
          %v1215 = vshrl.u32 %v1214, 7
          %v1216 = vsub.s32 0, %v1215
          %v1217 = vrot.slane %v1181, %v1216
          %v1219 = vadd.f32 %v1211, %v1217
          %v1220 = vadd.f32 %v1212, %v1217
          %v1221 = vpack.c.bf16 %v1220, %v1219
          %v1222 = vld [vmem:[%s11] sm:$0xff]
          %v1223 = vld [vmem:[%s11 + $0x8] sm:$0xff]
          %v1224 = vld [vmem:[%s11 + $0x10] sm:$0xff]
          %v1225 = vld [vmem:[%s11 + $0x18] sm:$0xff]
          %v1226 = vld [vmem:[%s11 + $0x20] sm:$0xff]
          %v1227 = vld [vmem:[%s11 + $0x28] sm:$0xff]
          %v1228 = vld [vmem:[%s11 + $0x30] sm:$0xff]
          %v1229 = vld [vmem:[%s11 + $0x38] sm:$0xff]
          %v1230 = vld [vmem:[%s11 + $0x40] sm:$0xff]
          %v1231 = vld [vmem:[%s11 + $0x48] sm:$0xff]
          %v1232 = vld [vmem:[%s11 + $0x50] sm:$0xff]
          %v1233 = vld [vmem:[%s11 + $0x58] sm:$0xff]
          %v1234 = vld [vmem:[%s11 + $0x60] sm:$0xff]
          %v1235 = vld [vmem:[%s11 + $0x68] sm:$0xff]
          %v1236 = vld [vmem:[%s11 + $0x70] sm:$0xff]
          %v1237 = vld [vmem:[%s11 + $0x78] sm:$0xff]
          %v1254 = vunpack.c.l.b16 %v1222
          %v1255 = vunpack.c.h.b16 %v1222
          %v1256 = vunpack.c.l.b16 %v1223
          %v1257 = vunpack.c.h.b16 %v1223
          %v1258 = vunpack.c.l.b16 %v1224
          %v1259 = vunpack.c.h.b16 %v1224
          %v1260 = vunpack.c.l.b16 %v1225
          %v1261 = vunpack.c.h.b16 %v1225
          %v1262 = vunpack.c.l.b16 %v1226
          %v1263 = vunpack.c.h.b16 %v1226
          %v1264 = vunpack.c.l.b16 %v1227
          %v1265 = vunpack.c.h.b16 %v1227
          %v1266 = vunpack.c.l.b16 %v1228
          %v1267 = vunpack.c.h.b16 %v1228
          %v1268 = vunpack.c.l.b16 %v1229
          %v1269 = vunpack.c.h.b16 %v1229
          %v1270 = vunpack.c.l.b16 %v1230
          %v1271 = vunpack.c.h.b16 %v1230
          %v1272 = vunpack.c.l.b16 %v1231
          %v1273 = vunpack.c.h.b16 %v1231
          %v1274 = vunpack.c.l.b16 %v1232
          %v1275 = vunpack.c.h.b16 %v1232
          %v1276 = vunpack.c.l.b16 %v1233
          %v1277 = vunpack.c.h.b16 %v1233
          %v1278 = vunpack.c.l.b16 %v1234
          %v1279 = vunpack.c.h.b16 %v1234
          %v1280 = vunpack.c.l.b16 %v1235
          %v1281 = vunpack.c.h.b16 %v1235
          %v1282 = vunpack.c.l.b16 %v1236
          %v1283 = vunpack.c.h.b16 %v1236
          %v1284 = vunpack.c.l.b16 %v1237
          %v1285 = vunpack.c.h.b16 %v1237
          %v1286 = vpack.c.b16 %v1256, %v1254
          %v1287 = vpack.c.b16 %v1257, %v1255
          %v1288 = vpack.c.b16 %v1260, %v1258
          %v1289 = vpack.c.b16 %v1261, %v1259
          %v1290 = vpack.c.b16 %v1264, %v1262
          %v1291 = vpack.c.b16 %v1265, %v1263
          %v1292 = vpack.c.b16 %v1268, %v1266
          %v1293 = vpack.c.b16 %v1269, %v1267
          %v1294 = vpack.c.b16 %v1272, %v1270
          %v1295 = vpack.c.b16 %v1273, %v1271
          %v1296 = vpack.c.b16 %v1276, %v1274
          %v1297 = vpack.c.b16 %v1277, %v1275
          %v1298 = vpack.c.b16 %v1280, %v1278
          %v1299 = vpack.c.b16 %v1281, %v1279
          %v1300 = vpack.c.b16 %v1284, %v1282
          %v1301 = vpack.c.b16 %v1285, %v1283
          %1318 = vmatprep.subr.bf16.mxu0 %v1301
          %1319 = vmatpush1.bf16.msra.mxu0 %v1300
          %1320 = vmatprep.subr.bf16.mxu0 %v1299
          %1321 = vmatpush1.bf16.msra.mxu0 %v1298
          %1322 = vmatprep.subr.bf16.mxu0 %v1297
          %1323 = vmatpush1.bf16.msra.mxu0 %v1296
          %1324 = vmatprep.subr.bf16.mxu0 %v1295
          %1325 = vmatpush1.bf16.msra.mxu0 %v1294
          %1326 = vmatprep.subr.bf16.mxu0 %v1293
          %1327 = vmatpush1.bf16.msra.mxu0 %v1292
          %1328 = vmatprep.subr.bf16.mxu0 %v1291
          %1329 = vmatpush1.bf16.msra.mxu0 %v1290
          %1330 = vmatprep.subr.bf16.mxu0 %v1289
          %1331 = vmatpush1.bf16.msra.mxu0 %v1288
          %1332 = vmatprep.subr.bf16.mxu0 %v1287
          %1333 = vmatpush1.bf16.msra.mxu0 %v1286
          %1334 = vmatprep.subr.bf16.mxu0 0
          %1335 = vmatpush2.bf16.msra.mxu0 0
          %1336 = vmatprep.subr.bf16.mxu0 0
          %1337 = vmatpush2.bf16.msra.mxu0 0
          %1338 = vmatprep.subr.bf16.mxu0 0
          %1339 = vmatpush2.bf16.msra.mxu0 0
          %1340 = vmatprep.subr.bf16.mxu0 0
          %1341 = vmatpush2.bf16.msra.mxu0 0
          %1342 = vmatprep.subr.bf16.mxu0 0
          %1343 = vmatpush2.bf16.msra.mxu0 0
          %1344 = vmatprep.subr.bf16.mxu0 0
          %1345 = vmatpush2.bf16.msra.mxu0 0
          %1346 = vmatprep.subr.bf16.mxu0 0
          %1347 = vmatpush2.bf16.msra.mxu0 0
          %1348 = vmatprep.subr.bf16.mxu0 0
          %1349 = vmatpush2.bf16.msra.mxu0 0
          %1350 = vmatprep.mubr.bf16.mxu0 0
          %1351 = vmatmul.mubr.bf16.gmra.mxu0 %v1221
          %v1352 = vpop.f32.mrf.mxu0
          %v1353 = vadd.f32 0.0, %v1352
          %v1354 = vpop.f32.mrf.mxu0
          %v1355 = vadd.f32 0.0, %v1354
          %v1356 = vpop.f32.mrf.mxu0
          %v1357 = vadd.f32 0.0, %v1356
          %v1358 = vpop.f32.mrf.mxu0
          %v1359 = vadd.f32 0.0, %v1358
          %1360 = vdwg.mxu0
          %v1361 = vmax.f32 %v1353, 0.0
          %v1362 = vmax.f32 %v1355, 0.0
          %v1363 = vmax.f32 %v1357, 0.0
          %v1364 = vmax.f32 %v1359, 0.0
          %v1365 = vpack.c.bf16 %v1363, %v1361
          %v1366 = vpack.c.bf16 %v1364, %v1362
          %v1367 = vld [vmem:[%s12] sm:$0xf]
          %v1368 = vld [vmem:[%s12 + $0x4] sm:$0xf]
          %v1369 = vld [vmem:[%s12 + $0x8] sm:$0xf]
          %v1370 = vld [vmem:[%s12 + $0xc] sm:$0xf]
          %v1371 = vld [vmem:[%s12 + $0x10] sm:$0xf]
          %v1372 = vld [vmem:[%s12 + $0x14] sm:$0xf]
          %v1373 = vld [vmem:[%s12 + $0x18] sm:$0xf]
          %v1374 = vld [vmem:[%s12 + $0x1c] sm:$0xf]
          %v1375 = vld [vmem:[%s12 + $0x20] sm:$0xf]
          %v1376 = vld [vmem:[%s12 + $0x24] sm:$0xf]
          %v1377 = vld [vmem:[%s12 + $0x28] sm:$0xf]
          %v1378 = vld [vmem:[%s12 + $0x2c] sm:$0xf]
          %v1379 = vld [vmem:[%s12 + $0x30] sm:$0xf]
          %v1380 = vld [vmem:[%s12 + $0x34] sm:$0xf]
          %v1381 = vld [vmem:[%s12 + $0x38] sm:$0xf]
          %v1382 = vld [vmem:[%s12 + $0x3c] sm:$0xf]
          %v1383 = vld [vmem:[%s12 + $0x40] sm:$0xf]
          %v1384 = vld [vmem:[%s12 + $0x44] sm:$0xf]
          %v1385 = vld [vmem:[%s12 + $0x48] sm:$0xf]
          %v1386 = vld [vmem:[%s12 + $0x4c] sm:$0xf]
          %v1387 = vld [vmem:[%s12 + $0x50] sm:$0xf]
          %v1388 = vld [vmem:[%s12 + $0x54] sm:$0xf]
          %v1389 = vld [vmem:[%s12 + $0x58] sm:$0xf]
          %v1390 = vld [vmem:[%s12 + $0x5c] sm:$0xf]
          %v1391 = vld [vmem:[%s12 + $0x60] sm:$0xf]
          %v1392 = vld [vmem:[%s12 + $0x64] sm:$0xf]
          %v1393 = vld [vmem:[%s12 + $0x68] sm:$0xf]
          %v1394 = vld [vmem:[%s12 + $0x6c] sm:$0xf]
          %v1395 = vld [vmem:[%s12 + $0x70] sm:$0xf]
          %v1396 = vld [vmem:[%s12 + $0x74] sm:$0xf]
          %v1397 = vld [vmem:[%s12 + $0x78] sm:$0xf]
          %v1398 = vld [vmem:[%s12 + $0x7c] sm:$0xf]
          %v1431 = vunpack.c.l.b16 %v1367
          %v1432 = vunpack.c.l.b16 %v1368
          %v1433 = vunpack.c.l.b16 %v1369
          %v1434 = vunpack.c.l.b16 %v1370
          %v1435 = vunpack.c.l.b16 %v1371
          %v1436 = vunpack.c.l.b16 %v1372
          %v1437 = vunpack.c.l.b16 %v1373
          %v1438 = vunpack.c.l.b16 %v1374
          %v1439 = vunpack.c.l.b16 %v1375
          %v1440 = vunpack.c.l.b16 %v1376
          %v1441 = vunpack.c.l.b16 %v1377
          %v1442 = vunpack.c.l.b16 %v1378
          %v1443 = vunpack.c.l.b16 %v1379
          %v1444 = vunpack.c.l.b16 %v1380
          %v1445 = vunpack.c.l.b16 %v1381
          %v1446 = vunpack.c.l.b16 %v1382
          %v1447 = vunpack.c.l.b16 %v1383
          %v1448 = vunpack.c.l.b16 %v1384
          %v1449 = vunpack.c.l.b16 %v1385
          %v1450 = vunpack.c.l.b16 %v1386
          %v1451 = vunpack.c.l.b16 %v1387
          %v1452 = vunpack.c.l.b16 %v1388
          %v1453 = vunpack.c.l.b16 %v1389
          %v1454 = vunpack.c.l.b16 %v1390
          %v1455 = vunpack.c.l.b16 %v1391
          %v1456 = vunpack.c.l.b16 %v1392
          %v1457 = vunpack.c.l.b16 %v1393
          %v1458 = vunpack.c.l.b16 %v1394
          %v1459 = vunpack.c.l.b16 %v1395
          %v1460 = vunpack.c.l.b16 %v1396
          %v1461 = vunpack.c.l.b16 %v1397
          %v1462 = vunpack.c.l.b16 %v1398
          %v1463 = vpack.c.b16 %v1432, %v1431
          %v1464 = vpack.c.b16 %v1434, %v1433
          %v1465 = vpack.c.b16 %v1436, %v1435
          %v1466 = vpack.c.b16 %v1438, %v1437
          %v1467 = vpack.c.b16 %v1440, %v1439
          %v1468 = vpack.c.b16 %v1442, %v1441
          %v1469 = vpack.c.b16 %v1444, %v1443
          %v1470 = vpack.c.b16 %v1446, %v1445
          %v1471 = vpack.c.b16 %v1448, %v1447
          %v1472 = vpack.c.b16 %v1450, %v1449
          %v1473 = vpack.c.b16 %v1452, %v1451
          %v1474 = vpack.c.b16 %v1454, %v1453
          %v1475 = vpack.c.b16 %v1456, %v1455
          %v1476 = vpack.c.b16 %v1458, %v1457
          %v1477 = vpack.c.b16 %v1460, %v1459
          %v1478 = vpack.c.b16 %v1462, %v1461
          %1495 = vmatprep.subr.bf16.mxu0 0
          %1496 = vmatpush1.bf16.msra.mxu0 %v1470
          %1497 = vmatprep.subr.bf16.mxu0 0
          %1498 = vmatpush1.bf16.msra.mxu0 %v1469
          %1499 = vmatprep.subr.bf16.mxu0 0
          %1500 = vmatpush1.bf16.msra.mxu0 %v1468
          %1501 = vmatprep.subr.bf16.mxu0 0
          %1502 = vmatpush1.bf16.msra.mxu0 %v1467
          %1503 = vmatprep.subr.bf16.mxu0 0
          %1504 = vmatpush1.bf16.msra.mxu0 %v1466
          %1505 = vmatprep.subr.bf16.mxu0 0
          %1506 = vmatpush1.bf16.msra.mxu0 %v1465
          %1507 = vmatprep.subr.bf16.mxu0 0
          %1508 = vmatpush1.bf16.msra.mxu0 %v1464
          %1509 = vmatprep.subr.bf16.mxu0 0
          %1510 = vmatpush1.bf16.msra.mxu0 %v1463
          %1511 = vmatprep.subr.bf16.mxu0 0
          %1512 = vmatpush2.bf16.msra.mxu0 %v1478
          %1513 = vmatprep.subr.bf16.mxu0 0
          %1514 = vmatpush2.bf16.msra.mxu0 %v1477
          %1515 = vmatprep.subr.bf16.mxu0 0
          %1516 = vmatpush2.bf16.msra.mxu0 %v1476
          %1517 = vmatprep.subr.bf16.mxu0 0
          %1518 = vmatpush2.bf16.msra.mxu0 %v1475
          %1519 = vmatprep.subr.bf16.mxu0 0
          %1520 = vmatpush2.bf16.msra.mxu0 %v1474
          %1521 = vmatprep.subr.bf16.mxu0 0
          %1522 = vmatpush2.bf16.msra.mxu0 %v1473
          %1523 = vmatprep.subr.bf16.mxu0 0
          %1524 = vmatpush2.bf16.msra.mxu0 %v1472
          %1525 = vmatprep.subr.bf16.mxu0 0
          %1526 = vmatpush2.bf16.msra.mxu0 %v1471
          %1527 = vmatprep.mubr.bf16.mxu0 %v1366
          %1528 = vmatmul.mubr.bf16.gmra.mxu0 %v1365
          %v1529 = vpop.f32.mrf.mxu0
          %v1530 = vadd.f32 0.0, %v1529
          %v1531 = vpop.f32.mrf.mxu0
          %v1532 = vpop.f32.mrf.mxu0
          %v1533 = vadd.f32 0.0, %v1532
          %v1534 = vpop.f32.mrf.mxu0
          %1535 = vdwg.mxu0
          %v1536 = vadd.f32 %v1219, %v1530
          %v1537 = vadd.f32 %v1220, %v1533
          %v1538 = vld [vmem:[%s13] sm:$0x1]
          %v1539 = vld [vmem:[%s14] sm:$0x1]
          %1540 = vadd.xlane.f32.xlu0 %v1536
          %v1541 = vpop.xlane.xlu0 %1540
          %1542 = vadd.xlane.f32.xlu0 %v1537
          %v1543 = vpop.xlane.xlu0 %1542
          %v1544 = vmul.f32 %v1541, %v1186
          %v1545 = vmul.f32 %v1543, %v1186
          %v1546 = vsub.f32 %v1536, %v1544
          %v1547 = vsub.f32 %v1537, %v1545
          %v1548 = vmul.f32 %v1546, %v1546
          %v1549 = vmul.f32 %v1547, %v1547
          %1550 = vadd.xlane.f32.xlu0 %v1548
          %v1551 = vpop.xlane.xlu0 %1550
          %1552 = vadd.xlane.f32.xlu0 %v1549
          %v1553 = vpop.xlane.xlu0 %1552
          %v1554 = vmul.f32 %v1551, %v1186
          %v1555 = vmul.f32 %v1553, %v1186
          %v1556 = vadd.f32 %v1554, 1e-05
          %v1557 = vadd.f32 %v1555, 1e-05
          %v1558 = vrsqrt.pop %v1556
          %v1559 = vrsqrt.pop %v1557
          %v1560 = vmul.f32 %v1546, %v1558
          %v1561 = vmul.f32 %v1547, %v1559
          %v1563 = vlaneseq
          %v1564 = vshrl.u32 %v1563, 7
          %v1565 = vsub.s32 0, %v1564
          %v1566 = vrot.slane %v1538, %v1565
          %v1568 = vmul.f32 %v1560, %v1566
          %v1569 = vmul.f32 %v1561, %v1566
          %v1571 = vlaneseq
          %v1572 = vshrl.u32 %v1571, 7
          %v1573 = vsub.s32 0, %v1572
          %v1574 = vrot.slane %v1539, %v1573
          %v1576 = vadd.f32 %v1568, %v1574
          %v1577 = vadd.f32 %v1569, %v1574
          %1578 = vst [vmem:[%s593] sm:$0xff] %v1576
          %1579 = vst [vmem:[%s593 + $0x8] sm:$0xff] %v1577
        $region88: #{tpu_custom_call.1} parent=79 // pred_fallthru
          _
        %s1580 = sand.u32 %s404, 1
        %s1581 = scalar_lea.sflag [#allocation4], %s1580
        %s1582 = sand.u32 %s404, 1
        %s1583 = smul.addr %s1582, 16
        %s1584 = scalar_lea.vmem [#allocation3], %s1583
        // Predicated region
        $region89: #{tpu_custom_call.1} parent=79 // pred_check
          %p1585 = pneg %p414
        $region90: #{tpu_custom_call.1} parent=79 // pred_check_branch
          %1587 = sbr.rel (%p1585) target = $region92
        $region91: #{tpu_custom_call.1} parent=79 // pred_region
          %s1589 = ssub.s32 256, 256
          %1590 = vsyncadd %s1581, %s1589
          %s1591 = smul.addr %s33, 2
          %s1592 = smul.addr %s1591, 128
          %s1593 = scalar_lea.hbm %s15, %s1592
          %s1594 = sshll.u32 %s1584, 4
          %s1595 = int_to_ptr.vmem [resolvable:$true] %s1594
          %1600 = dma.vmem_to_hbm [thread:$0]  %s1595, 256, %s1593, %s1581, 128, 128, 8
        $region92: #{tpu_custom_call.1} parent=79 // pred_fallthru
          _
      $region80: #{tpu_custom_call.1} parent=5 // pred_fallthru
        _
      %p1601 = scmp.le.s32.totalorder 2, %s24
      // Predicated region
      $region93: #{tpu_custom_call.1} parent=5 // pred_check
        %p1602 = pneg %p1601
      $region94: #{tpu_custom_call.1} parent=5 // pred_check_branch
        %1604 = sbr.rel (%p1602) target = $region96
      $region95: #{tpu_custom_call.1} parent=5 // pred_region
        %s1605 = ssub.s32 %s24, 2
        // Predicated region
        $region97: #{tpu_custom_call.1} parent=95 // pred_check
          %p1606 = pneg %p420
        $region98: #{tpu_custom_call.1} parent=95 // pred_check_branch
          %1608 = sbr.rel (%p1606) target = $region100
        $region99: #{tpu_custom_call.1} parent=95 // pred_region
          %s1609 = sand.u32 %s405, 1
          %s1610 = scalar_lea.sflag [#allocation4], %s1609
          %s1611 = sand.u32 %s405, 1
          %s1612 = smul.addr %s1611, 16
          %s1613 = scalar_lea.vmem [#allocation3], %s1612
          %1614 = dma.done %s1610, 256
        $region100: #{tpu_custom_call.1} parent=95 // pred_fallthru
          _
      $region96: #{tpu_custom_call.1} parent=5 // pred_fallthru
        _
    $region6: #{tpu_custom_call.1} parent=1 // loop_footer
      %s28 = sadd.s32 1, %s24
    $region7: #{tpu_custom_call.1} parent=1 // loop_footer_branch
      %23 = sbr.rel target = $region3
    $region8: #{tpu_custom_call.1} parent=1 // loop_exit
      _
    %1615 = vsyncpa [#allocation4], 1
    %s1616 = scalar_lea.sflag [#allocation4], 1
    %1617 = vsyncpa %s1616, 1

</llo_original>
